<compile_context>
chip_gen: v7x
topology: tpu7x:2x2x1
jax: 0.10.0
libtpu: 0.0.40
codegen_flags: <defaults>
</compile_context>

<pallas_src>
import jax
import jax.numpy as jnp
from jax.experimental import pallas as pl
from jax.experimental.pallas import tpu as pltpu


# ----------------------------- kernel ---------------------------------------


def _gru_chunk_kernel(gi_ref, h0_ref, wh_ref, bhn_ref, out_ref, h_scr):
    """Runs Tc GRU timesteps for one chunk of the sequence.

    gi_ref : (Tc, 3H) f32  precomputed x @ W_ih^T + folded biases, order r|z|n
    h0_ref : (1, H)   f32  initial hidden (read only at chunk 0)
    wh_ref : (H, 3H)  bf16 fused W_hh^T (VMEM-resident, constant index_map)
    bhn_ref: (1, H)   f32  b_hn (only bias that can't be folded into GI)
    out_ref: (Tc, H)  f32  hidden state after each step (== GRU output)
    h_scr  : (1, H)   f32  hidden state carried across chunks
    """
    H = h_scr.shape[1]
    Tc = out_ref.shape[0]

    @pl.when(pl.program_id(0) == 0)
    def _():
        h_scr[...] = h0_ref[...]

    # Hoisted once per chunk (JAX does not CSE loads/broadcasts inside loops).
    wh = wh_ref[...]            # (H, 3H) bf16
    b_hn = bhn_ref[...]         # (1, H)  f32

    # Fully-unrolled in-kernel time loop (Tc is small and static): static
    # sublane slices / stores, LLO can overlap EUP pushes with next step.
    h = h_scr[...]
    for i in range(Tc):
        # The only matmul left on the serial path: (1,H) x (H,3H), bf16 MXU.
        gh = jnp.dot(h.astype(jnp.bfloat16), wh,
                     preferred_element_type=jnp.float32)        # (1, 3H)
        gi = gi_ref[i:i + 1, :]                                 # (1, 3H)
        # PyTorch GRU gate order r, z, n; r/z/in biases already folded in gi.
        r = jax.nn.sigmoid(gi[:, 0:H] + gh[:, 0:H])
        z = jax.nn.sigmoid(gi[:, H:2 * H] + gh[:, H:2 * H])
        n = jnp.tanh(gi[:, 2 * H:3 * H] + r * (gh[:, 2 * H:3 * H] + b_hn))
        h = (1.0 - z) * n + z * h
        out_ref[i:i + 1, :] = h
    h_scr[...] = h


# ----------------------------- wrappers --------------------------------------


def _run_gru_sequence(tokens, h0_2d, params, chunk=8):
    """Run the GRU over `tokens` (int32[T]); returns (T, H) f32 hidden states."""
    emb = params["embedding"]          # (V, H)  f32
    wi = params["w_i_t"]               # (H, 3H) bf16
    wh = params["w_h_t"]               # (H, 3H) bf16
    bias_i = params["bias_i"]          # (3H,)   f32  [b_ir+b_hr | b_iz+b_hz | b_in]
    b_hn = params["b_hn"]              # (1, H)  f32
    H = emb.shape[1]
    T = int(tokens.shape[0])

    # ---- hoisted input projection: ONE batched MXU matmul for all steps ----
    x = emb[tokens.astype(jnp.int32)]                                  # (T, H)
    gi = jnp.dot(x.astype(jnp.bfloat16), wi,
                 preferred_element_type=jnp.float32) + bias_i          # (T, 3H)

    Tc = chunk                                   # keep modest (8..32): unrolled
    T_pad = ((T + Tc - 1) // Tc) * Tc
    if T_pad != T:
        # Trailing pad only — garbage steps can never contaminate valid ones.
        gi = jnp.pad(gi, ((0, T_pad - T), (0, 0)))
    n_chunks = T_pad // Tc

    const = lambda shape: pl.BlockSpec(shape, lambda c: (0, 0))

    out = pl.pallas_call(
        _gru_chunk_kernel,
        out_shape=jax.ShapeDtypeStruct((T_pad, H), jnp.float32),
        grid_spec=pltpu.PrefetchScalarGridSpec(
            num_scalar_prefetch=0,
            grid=(n_chunks,),
            in_specs=[
                pl.BlockSpec((Tc, 3 * H), lambda c: (c, 0)),   # GI chunk
                const((1, H)),                                 # initial hidden
                const((H, 3 * H)),                             # W_hh^T (resident)
                const((1, H)),                                 # b_hn   (resident)
            ],
            out_specs=pl.BlockSpec((Tc, H), lambda c: (c, 0)),
            scratch_shapes=[pltpu.VMEM((1, H), jnp.float32)],
        ),
        compiler_params=pltpu.CompilerParams(
            # Time axis is a true recurrence (hidden carried in scratch).
            dimension_semantics=("arbitrary",),
        ),
    )(gi, h0_2d, wh, b_hn)
    return out[:T]                                                     # (T, H)


def encoder_rnn_forward(token_id, hidden, params):
    """Pallas equivalent of EncoderRNN.forward(input, hidden) (single token).

    token_id : int32 array (1,)
    hidden   : float32 array (1, 1, H)
    returns  : (output (1, 1, H), hidden (1, 1, H))
    """
    H = params["embedding"].shape[1]
    out = _run_gru_sequence(token_id.reshape(1), hidden.reshape(1, H), params)
    h_new = out[0].reshape(1, 1, H)
    return h_new, h_new          # single-layer GRU: output == new hidden


def encoder_rnn_encode(tokens, hidden, params):
    """Whole-sequence encode: recurrence amortized inside one pallas_call.

    tokens : int32 array (T,)
    hidden : float32 array (1, 1, H)
    returns: (outputs (T, 1, H), final hidden (1, 1, H))
    """
    H = params["embedding"].shape[1]
    T = int(tokens.shape[0])
    out = _run_gru_sequence(tokens, hidden.reshape(1, H), params)      # (T, H)
    return out.reshape(T, 1, H), out[T - 1].reshape(1, 1, H)


# ----------------------------- reference ------------------------------------


def _reference_encode(tokens, hidden, params, mirror_kernel=False):
    """Pure-JAX GRU reference.

    mirror_kernel=False : raw f32 PyTorch-shaped params (module semantics).
    mirror_kernel=True  : same bf16 weight cast / f32 accumulation as kernel.
    """
    H = params["embedding"].shape[1]
    emb = params["embedding"]
    b_ih, b_hh = params["b_ih"], params["b_hh"]
    if mirror_kernel:
        wi_t, wh_t = params["w_i_t"], params["w_h_t"]          # bf16 fused
        cast = lambda a: a.astype(jnp.bfloat16)
    else:
        wi_t, wh_t = params["w_ih"].T, params["w_hh"].T        # raw f32
        cast = lambda a: a
    h = hidden.reshape(1, H).astype(jnp.float32)
    outs = []
    for t in range(int(tokens.shape[0])):
        x = emb[tokens[t]].reshape(1, H)
        gi = jnp.dot(cast(x), wi_t, preferred_element_type=jnp.float32) + b_ih
        gh = jnp.dot(cast(h), wh_t, preferred_element_type=jnp.float32) + b_hh
        r = jax.nn.sigmoid(gi[:, 0:H] + gh[:, 0:H])
        z = jax.nn.sigmoid(gi[:, H:2 * H] + gh[:, H:2 * H])
        n = jnp.tanh(gi[:, 2 * H:] + r * gh[:, 2 * H:])
        h = (1.0 - z) * n + z * h
        outs.append(h)
    return jnp.stack(outs, axis=0), h.reshape(1, 1, H)   # (T,1,H), (1,1,H)


# ----------------------------- params ---------------------------------------


def init_params(key, vocab_size, hidden_size):
    """Synthetic parameters with PyTorch-consistent shapes, plus fused copies.

    nn.Embedding(V, H) -> embedding (V, H)
    nn.GRU(H, H): weight_ih (3H, H), weight_hh (3H, H), bias_ih (3H,), bias_hh (3H,)
    Gate order r, z, n.  Kernel uses:
      w_i_t  = weight_ih.T (H, 3H) bf16   (input projection, hoisted outside)
      w_h_t  = weight_hh.T (H, 3H) bf16   (recurrent projection, in-kernel)
      bias_i = (3H,) [b_ir+b_hr | b_iz+b_hz | b_in]  folded into GI precompute
      b_hn   = (1, H)                                 the only in-kernel bias
    """
    H = hidden_size
    assert H % 128 == 0, "gate slices assume lane-aligned H (pad H to 128)"
    ks = jax.random.split(key, 5)
    bound = float(H) ** -0.5

    emb = jax.random.normal(ks[0], (vocab_size, H), jnp.float32)
    w_ih = jax.random.uniform(ks[1], (3 * H, H), jnp.float32, -bound, bound)
    w_hh = jax.random.uniform(ks[2], (3 * H, H), jnp.float32, -bound, bound)
    b_ih = jax.random.uniform(ks[3], (3 * H,), jnp.float32, -bound, bound)
    b_hh = jax.random.uniform(ks[4], (3 * H,), jnp.float32, -bound, bound)

    bias_i = jnp.concatenate([
        b_ih[0:H] + b_hh[0:H],             # r gate (both biases foldable)
        b_ih[H:2 * H] + b_hh[H:2 * H],     # z gate (both biases foldable)
        b_ih[2 * H:3 * H],                 # n gate: only b_in foldable
    ])                                     # (3H,)

    return {
        "embedding": emb,
        # raw PyTorch-shaped params (used only by the pure-JAX reference)
        "w_ih": w_ih, "w_hh": w_hh, "b_ih": b_ih, "b_hh": b_hh,
        # fused params consumed by the wrapper / kernel
        "w_i_t": jnp.asarray(w_ih.T).astype(jnp.bfloat16),   # (H, 3H)
        "w_h_t": jnp.asarray(w_hh.T).astype(jnp.bfloat16),   # (H, 3H)
        "bias_i": bias_i,                                    # (3H,)
        "b_hn": b_hh[2 * H:3 * H].reshape(1, H),             # (1, H)
    }


if __name__ == "__main__":
    VOCAB = 32
    HIDDEN = 128      # lane-dense (multiple of 128); module uses 256 at scale
    SEQ = 8

    key = jax.random.PRNGKey(0)
    k_params, k_hidden, k_tok = jax.random.split(key, 3)

    params = init_params(k_params, VOCAB, HIDDEN)
    tokens = jax.random.randint(k_tok, (SEQ,), 0, VOCAB, dtype=jnp.int32)
    hidden0 = jax.random.normal(k_hidden, (1, 1, HIDDEN), jnp.float32)

    # --- single-step call: identical semantics to EncoderRNN.forward --------
    out1, h1 = encoder_rnn_forward(tokens[:1], hidden0, params)
    out1 = jax.block_until_ready(out1)
    h1 = jax.block_until_ready(h1)
    refm1_outs, refm1_h = _reference_encode(tokens[:1], hidden0, params,
                                            mirror_kernel=True)
    assert out1.shape == (1, 1, HIDDEN) and h1.shape == (1, 1, HIDDEN)
    assert jnp.allclose(out1, refm1_outs[0].reshape(1, 1, HIDDEN),
                        atol=2e-3, rtol=2e-3)
    assert jnp.allclose(h1, refm1_h, atol=2e-3, rtol=2e-3)

    # --- whole-sequence encode: recurrence inside a single pallas_call ------
    outs, h_final = encoder_rnn_encode(tokens, hidden0, params)
    outs = jax.block_until_ready(outs)
    h_final = jax.block_until_ready(h_final)
    assert outs.shape == (SEQ, 1, HIDDEN) and h_final.shape == (1, 1, HIDDEN)

    # Tight check vs. a reference with the kernel's bf16 weights (logic check).
    refm_outs, refm_h = _reference_encode(tokens, hidden0, params,
                                          mirror_kernel=True)
    assert jnp.allclose(outs, refm_outs, atol=2e-3, rtol=2e-3)
    assert jnp.allclose(h_final, refm_h, atol=2e-3, rtol=2e-3)

    # Loose check vs. the raw-f32 PyTorch-semantics reference (bf16 weights).
    ref_outs, ref_h = _reference_encode(tokens, hidden0, params,
                                        mirror_kernel=False)
    assert jnp.allclose(outs, ref_outs, atol=3e-2, rtol=3e-2)
    assert jnp.allclose(h_final, ref_h, atol=3e-2, rtol=3e-2)

    print("KERNEL_OK")
</pallas_src>

<mosaic_0001>
module attributes {stable_mosaic.version = 11 : i64} {
  func.func @_gru_chunk_kernel(%arg0: i32, %arg1: memref<8x384xf32, #tpu.memory_space<vmem>>, %arg2: memref<1x128xf32, #tpu.memory_space<vmem>>, %arg3: memref<128x384xbf16, #tpu.memory_space<vmem>>, %arg4: memref<1x128xf32, #tpu.memory_space<vmem>>, %arg5: memref<8x128xf32, #tpu.memory_space<vmem>>, %arg6: memref<1x128xf32, #tpu.memory_space<vmem>>) attributes {dimension_semantics = [#tpu.dimension_semantics<arbitrary>], iteration_bounds = array<i64: 1>, scalar_prefetch = 0 : i64, scratch_operands = 1 : i64, tpu.core_type = #tpu.core_type<tc>, window_params = [{transform_indices = @transform_0, window_bounds = array<i64: 8, 384>}, {pipeline_mode = #tpu.pipeline_mode<synchronous>, transform_indices = @transform_1, window_bounds = array<i64: 1, 128>}, {pipeline_mode = #tpu.pipeline_mode<synchronous>, transform_indices = @transform_2, window_bounds = array<i64: 128, 384>}, {pipeline_mode = #tpu.pipeline_mode<synchronous>, transform_indices = @transform_3, window_bounds = array<i64: 1, 128>}, {transform_indices = @transform_4, window_bounds = array<i64: 8, 128>}]} {
    %c0_i32 = arith.constant 0 : i32
    %0 = arith.cmpi eq, %arg0, %c0_i32 : i32
    %1 = arith.extui %0 : i1 to i32
    %c0_i32_0 = arith.constant 0 : i32
    %2 = arith.cmpi ne, %1, %c0_i32_0 : i32
    scf.if %2 {
      %c0_64 = arith.constant 0 : index
      %c0_65 = arith.constant 0 : index
      %255 = vector.load %arg2[%c0_64, %c0_65] : memref<1x128xf32, #tpu.memory_space<vmem>>, vector<1x128xf32>
      %c0_66 = arith.constant 0 : index
      %c0_67 = arith.constant 0 : index
      %256 = vector.load %arg6[%c0_66, %c0_67] : memref<1x128xf32, #tpu.memory_space<vmem>>, vector<1x128xf32>
      tpu.vector_store %arg6[%c0_66, %c0_67], %255 {strides = array<i32>} : memref<1x128xf32, #tpu.memory_space<vmem>>, vector<1x128xf32>,
    } else {
    }
    %c0 = arith.constant 0 : index
    %c0_1 = arith.constant 0 : index
    %3 = vector.load %arg3[%c0, %c0_1] : memref<128x384xbf16, #tpu.memory_space<vmem>>, vector<128x384xbf16>
    %c0_2 = arith.constant 0 : index
    %c0_3 = arith.constant 0 : index
    %4 = vector.load %arg4[%c0_2, %c0_3] : memref<1x128xf32, #tpu.memory_space<vmem>>, vector<1x128xf32>
    %c0_4 = arith.constant 0 : index
    %c0_5 = arith.constant 0 : index
    %5 = vector.load %arg6[%c0_4, %c0_5] : memref<1x128xf32, #tpu.memory_space<vmem>>, vector<1x128xf32>
    %6 = arith.truncf %5 : vector<1x128xf32> to vector<1x128xbf16>
    %cst = arith.constant dense<0.000000e+00> : vector<1x384xf32>
    %7 = tpu.matmul %6, %3, %cst {dimension_numbers = #tpu.dot_dimension_numbers<[1], [0], [0], [1], [0, 0, 1, 1], [], []>} : vector<1x128xbf16>, vector<128x384xbf16>, vector<1x384xf32> -> vector<1x384xf32>
    %c0_6 = arith.constant 0 : index
    %c0_7 = arith.constant 0 : index
    %8 = vector.load %arg1[%c0_6, %c0_7] : memref<8x384xf32, #tpu.memory_space<vmem>>, vector<1x384xf32>
    %9 = vector.extract_strided_slice %8 {offsets = [0, 0], sizes = [1, 128], strides = [1, 1]} : vector<1x384xf32> to vector<1x128xf32>
    %10 = vector.extract_strided_slice %7 {offsets = [0, 0], sizes = [1, 128], strides = [1, 1]} : vector<1x384xf32> to vector<1x128xf32>
    %11 = arith.addf %9, %10 : vector<1x128xf32>
    %12 = arith.negf %11 : vector<1x128xf32>
    %13 = math.exp %12 : vector<1x128xf32>
    %cst_8 = arith.constant 1.000000e+00 : f32
    %14 = vector.broadcast %cst_8 : f32 to vector<1x128xf32>
    %15 = arith.addf %14, %13 : vector<1x128xf32>
    %16 = arith.divf %14, %15 : vector<1x128xf32>
    %17 = vector.extract_strided_slice %8 {offsets = [0, 128], sizes = [1, 128], strides = [1, 1]} : vector<1x384xf32> to vector<1x128xf32>
    %18 = vector.extract_strided_slice %7 {offsets = [0, 128], sizes = [1, 128], strides = [1, 1]} : vector<1x384xf32> to vector<1x128xf32>
    %19 = arith.addf %17, %18 : vector<1x128xf32>
    %20 = arith.negf %19 : vector<1x128xf32>
    %21 = math.exp %20 : vector<1x128xf32>
    %cst_9 = arith.constant 1.000000e+00 : f32
    %22 = vector.broadcast %cst_9 : f32 to vector<1x128xf32>
    %23 = arith.addf %22, %21 : vector<1x128xf32>
    %24 = arith.divf %22, %23 : vector<1x128xf32>
    %25 = vector.extract_strided_slice %8 {offsets = [0, 256], sizes = [1, 128], strides = [1, 1]} : vector<1x384xf32> to vector<1x128xf32>
    %26 = vector.extract_strided_slice %7 {offsets = [0, 256], sizes = [1, 128], strides = [1, 1]} : vector<1x384xf32> to vector<1x128xf32>
    %27 = arith.addf %26, %4 : vector<1x128xf32>
    %28 = arith.mulf %16, %27 : vector<1x128xf32>
    %29 = arith.addf %25, %28 : vector<1x128xf32>
    %30 = math.tanh %29 : vector<1x128xf32>
    %cst_10 = arith.constant 1.000000e+00 : f32
    %31 = vector.broadcast %cst_10 : f32 to vector<1x128xf32>
    %32 = arith.subf %31, %24 : vector<1x128xf32>
    %33 = arith.mulf %32, %30 : vector<1x128xf32>
    %34 = arith.mulf %24, %5 : vector<1x128xf32>
    %35 = arith.addf %33, %34 : vector<1x128xf32>
    %c0_11 = arith.constant 0 : index
    %c0_12 = arith.constant 0 : index
    %36 = vector.load %arg5[%c0_11, %c0_12] : memref<8x128xf32, #tpu.memory_space<vmem>>, vector<1x128xf32>
    tpu.vector_store %arg5[%c0_11, %c0_12], %35 {strides = array<i32>} : memref<8x128xf32, #tpu.memory_space<vmem>>, vector<1x128xf32>,
    %37 = arith.truncf %35 : vector<1x128xf32> to vector<1x128xbf16>
    %cst_13 = arith.constant dense<0.000000e+00> : vector<1x384xf32>
    %38 = tpu.matmul %37, %3, %cst_13 {dimension_numbers = #tpu.dot_dimension_numbers<[1], [0], [0], [1], [0, 0, 1, 1], [], []>} : vector<1x128xbf16>, vector<128x384xbf16>, vector<1x384xf32> -> vector<1x384xf32>
    %c1 = arith.constant 1 : index
    %c0_14 = arith.constant 0 : index
    %39 = vector.load %arg1[%c1, %c0_14] : memref<8x384xf32, #tpu.memory_space<vmem>>, vector<1x384xf32>
    %40 = vector.extract_strided_slice %39 {offsets = [0, 0], sizes = [1, 128], strides = [1, 1]} : vector<1x384xf32> to vector<1x128xf32>
    %41 = vector.extract_strided_slice %38 {offsets = [0, 0], sizes = [1, 128], strides = [1, 1]} : vector<1x384xf32> to vector<1x128xf32>
    %42 = arith.addf %40, %41 : vector<1x128xf32>
    %43 = arith.negf %42 : vector<1x128xf32>
    %44 = math.exp %43 : vector<1x128xf32>
    %cst_15 = arith.constant 1.000000e+00 : f32
    %45 = vector.broadcast %cst_15 : f32 to vector<1x128xf32>
    %46 = arith.addf %45, %44 : vector<1x128xf32>
    %47 = arith.divf %45, %46 : vector<1x128xf32>
    %48 = vector.extract_strided_slice %39 {offsets = [0, 128], sizes = [1, 128], strides = [1, 1]} : vector<1x384xf32> to vector<1x128xf32>
    %49 = vector.extract_strided_slice %38 {offsets = [0, 128], sizes = [1, 128], strides = [1, 1]} : vector<1x384xf32> to vector<1x128xf32>
    %50 = arith.addf %48, %49 : vector<1x128xf32>
    %51 = arith.negf %50 : vector<1x128xf32>
    %52 = math.exp %51 : vector<1x128xf32>
    %cst_16 = arith.constant 1.000000e+00 : f32
    %53 = vector.broadcast %cst_16 : f32 to vector<1x128xf32>
    %54 = arith.addf %53, %52 : vector<1x128xf32>
    %55 = arith.divf %53, %54 : vector<1x128xf32>
    %56 = vector.extract_strided_slice %39 {offsets = [0, 256], sizes = [1, 128], strides = [1, 1]} : vector<1x384xf32> to vector<1x128xf32>
    %57 = vector.extract_strided_slice %38 {offsets = [0, 256], sizes = [1, 128], strides = [1, 1]} : vector<1x384xf32> to vector<1x128xf32>
    %58 = arith.addf %57, %4 : vector<1x128xf32>
    %59 = arith.mulf %47, %58 : vector<1x128xf32>
    %60 = arith.addf %56, %59 : vector<1x128xf32>
    %61 = math.tanh %60 : vector<1x128xf32>
    %cst_17 = arith.constant 1.000000e+00 : f32
    %62 = vector.broadcast %cst_17 : f32 to vector<1x128xf32>
    %63 = arith.subf %62, %55 : vector<1x128xf32>
    %64 = arith.mulf %63, %61 : vector<1x128xf32>
    %65 = arith.mulf %55, %35 : vector<1x128xf32>
    %66 = arith.addf %64, %65 : vector<1x128xf32>
    %c1_18 = arith.constant 1 : index
    %c0_19 = arith.constant 0 : index
    %67 = vector.load %arg5[%c1_18, %c0_19] : memref<8x128xf32, #tpu.memory_space<vmem>>, vector<1x128xf32>
    tpu.vector_store %arg5[%c1_18, %c0_19], %66 {strides = array<i32>} : memref<8x128xf32, #tpu.memory_space<vmem>>, vector<1x128xf32>,
    %68 = arith.truncf %66 : vector<1x128xf32> to vector<1x128xbf16>
    %cst_20 = arith.constant dense<0.000000e+00> : vector<1x384xf32>
    %69 = tpu.matmul %68, %3, %cst_20 {dimension_numbers = #tpu.dot_dimension_numbers<[1], [0], [0], [1], [0, 0, 1, 1], [], []>} : vector<1x128xbf16>, vector<128x384xbf16>, vector<1x384xf32> -> vector<1x384xf32>
    %c2 = arith.constant 2 : index
    %c0_21 = arith.constant 0 : index
    %70 = vector.load %arg1[%c2, %c0_21] : memref<8x384xf32, #tpu.memory_space<vmem>>, vector<1x384xf32>
    %71 = vector.extract_strided_slice %70 {offsets = [0, 0], sizes = [1, 128], strides = [1, 1]} : vector<1x384xf32> to vector<1x128xf32>
    %72 = vector.extract_strided_slice %69 {offsets = [0, 0], sizes = [1, 128], strides = [1, 1]} : vector<1x384xf32> to vector<1x128xf32>
    %73 = arith.addf %71, %72 : vector<1x128xf32>
    %74 = arith.negf %73 : vector<1x128xf32>
    %75 = math.exp %74 : vector<1x128xf32>
    %cst_22 = arith.constant 1.000000e+00 : f32
    %76 = vector.broadcast %cst_22 : f32 to vector<1x128xf32>
    %77 = arith.addf %76, %75 : vector<1x128xf32>
    %78 = arith.divf %76, %77 : vector<1x128xf32>
    %79 = vector.extract_strided_slice %70 {offsets = [0, 128], sizes = [1, 128], strides = [1, 1]} : vector<1x384xf32> to vector<1x128xf32>
    %80 = vector.extract_strided_slice %69 {offsets = [0, 128], sizes = [1, 128], strides = [1, 1]} : vector<1x384xf32> to vector<1x128xf32>
    %81 = arith.addf %79, %80 : vector<1x128xf32>
    %82 = arith.negf %81 : vector<1x128xf32>
    %83 = math.exp %82 : vector<1x128xf32>
    %cst_23 = arith.constant 1.000000e+00 : f32
    %84 = vector.broadcast %cst_23 : f32 to vector<1x128xf32>
    %85 = arith.addf %84, %83 : vector<1x128xf32>
    %86 = arith.divf %84, %85 : vector<1x128xf32>
    %87 = vector.extract_strided_slice %70 {offsets = [0, 256], sizes = [1, 128], strides = [1, 1]} : vector<1x384xf32> to vector<1x128xf32>
    %88 = vector.extract_strided_slice %69 {offsets = [0, 256], sizes = [1, 128], strides = [1, 1]} : vector<1x384xf32> to vector<1x128xf32>
    %89 = arith.addf %88, %4 : vector<1x128xf32>
    %90 = arith.mulf %78, %89 : vector<1x128xf32>
    %91 = arith.addf %87, %90 : vector<1x128xf32>
    %92 = math.tanh %91 : vector<1x128xf32>
    %cst_24 = arith.constant 1.000000e+00 : f32
    %93 = vector.broadcast %cst_24 : f32 to vector<1x128xf32>
    %94 = arith.subf %93, %86 : vector<1x128xf32>
    %95 = arith.mulf %94, %92 : vector<1x128xf32>
    %96 = arith.mulf %86, %66 : vector<1x128xf32>
    %97 = arith.addf %95, %96 : vector<1x128xf32>
    %c2_25 = arith.constant 2 : index
    %c0_26 = arith.constant 0 : index
    %98 = vector.load %arg5[%c2_25, %c0_26] : memref<8x128xf32, #tpu.memory_space<vmem>>, vector<1x128xf32>
    tpu.vector_store %arg5[%c2_25, %c0_26], %97 {strides = array<i32>} : memref<8x128xf32, #tpu.memory_space<vmem>>, vector<1x128xf32>,
    %99 = arith.truncf %97 : vector<1x128xf32> to vector<1x128xbf16>
    %cst_27 = arith.constant dense<0.000000e+00> : vector<1x384xf32>
    %100 = tpu.matmul %99, %3, %cst_27 {dimension_numbers = #tpu.dot_dimension_numbers<[1], [0], [0], [1], [0, 0, 1, 1], [], []>} : vector<1x128xbf16>, vector<128x384xbf16>, vector<1x384xf32> -> vector<1x384xf32>
    %c3 = arith.constant 3 : index
    %c0_28 = arith.constant 0 : index
    %101 = vector.load %arg1[%c3, %c0_28] : memref<8x384xf32, #tpu.memory_space<vmem>>, vector<1x384xf32>
    %102 = vector.extract_strided_slice %101 {offsets = [0, 0], sizes = [1, 128], strides = [1, 1]} : vector<1x384xf32> to vector<1x128xf32>
    %103 = vector.extract_strided_slice %100 {offsets = [0, 0], sizes = [1, 128], strides = [1, 1]} : vector<1x384xf32> to vector<1x128xf32>
    %104 = arith.addf %102, %103 : vector<1x128xf32>
    %105 = arith.negf %104 : vector<1x128xf32>
    %106 = math.exp %105 : vector<1x128xf32>
    %cst_29 = arith.constant 1.000000e+00 : f32
    %107 = vector.broadcast %cst_29 : f32 to vector<1x128xf32>
    %108 = arith.addf %107, %106 : vector<1x128xf32>
    %109 = arith.divf %107, %108 : vector<1x128xf32>
    %110 = vector.extract_strided_slice %101 {offsets = [0, 128], sizes = [1, 128], strides = [1, 1]} : vector<1x384xf32> to vector<1x128xf32>
    %111 = vector.extract_strided_slice %100 {offsets = [0, 128], sizes = [1, 128], strides = [1, 1]} : vector<1x384xf32> to vector<1x128xf32>
    %112 = arith.addf %110, %111 : vector<1x128xf32>
    %113 = arith.negf %112 : vector<1x128xf32>
    %114 = math.exp %113 : vector<1x128xf32>
    %cst_30 = arith.constant 1.000000e+00 : f32
    %115 = vector.broadcast %cst_30 : f32 to vector<1x128xf32>
    %116 = arith.addf %115, %114 : vector<1x128xf32>
    %117 = arith.divf %115, %116 : vector<1x128xf32>
    %118 = vector.extract_strided_slice %101 {offsets = [0, 256], sizes = [1, 128], strides = [1, 1]} : vector<1x384xf32> to vector<1x128xf32>
    %119 = vector.extract_strided_slice %100 {offsets = [0, 256], sizes = [1, 128], strides = [1, 1]} : vector<1x384xf32> to vector<1x128xf32>
    %120 = arith.addf %119, %4 : vector<1x128xf32>
    %121 = arith.mulf %109, %120 : vector<1x128xf32>
    %122 = arith.addf %118, %121 : vector<1x128xf32>
    %123 = math.tanh %122 : vector<1x128xf32>
    %cst_31 = arith.constant 1.000000e+00 : f32
    %124 = vector.broadcast %cst_31 : f32 to vector<1x128xf32>
    %125 = arith.subf %124, %117 : vector<1x128xf32>
    %126 = arith.mulf %125, %123 : vector<1x128xf32>
    %127 = arith.mulf %117, %97 : vector<1x128xf32>
    %128 = arith.addf %126, %127 : vector<1x128xf32>
    %c3_32 = arith.constant 3 : index
    %c0_33 = arith.constant 0 : index
    %129 = vector.load %arg5[%c3_32, %c0_33] : memref<8x128xf32, #tpu.memory_space<vmem>>, vector<1x128xf32>
    tpu.vector_store %arg5[%c3_32, %c0_33], %128 {strides = array<i32>} : memref<8x128xf32, #tpu.memory_space<vmem>>, vector<1x128xf32>,
    %130 = arith.truncf %128 : vector<1x128xf32> to vector<1x128xbf16>
    %cst_34 = arith.constant dense<0.000000e+00> : vector<1x384xf32>
    %131 = tpu.matmul %130, %3, %cst_34 {dimension_numbers = #tpu.dot_dimension_numbers<[1], [0], [0], [1], [0, 0, 1, 1], [], []>} : vector<1x128xbf16>, vector<128x384xbf16>, vector<1x384xf32> -> vector<1x384xf32>
    %c4 = arith.constant 4 : index
    %c0_35 = arith.constant 0 : index
    %132 = vector.load %arg1[%c4, %c0_35] : memref<8x384xf32, #tpu.memory_space<vmem>>, vector<1x384xf32>
    %133 = vector.extract_strided_slice %132 {offsets = [0, 0], sizes = [1, 128], strides = [1, 1]} : vector<1x384xf32> to vector<1x128xf32>
    %134 = vector.extract_strided_slice %131 {offsets = [0, 0], sizes = [1, 128], strides = [1, 1]} : vector<1x384xf32> to vector<1x128xf32>
    %135 = arith.addf %133, %134 : vector<1x128xf32>
    %136 = arith.negf %135 : vector<1x128xf32>
    %137 = math.exp %136 : vector<1x128xf32>
    %cst_36 = arith.constant 1.000000e+00 : f32
    %138 = vector.broadcast %cst_36 : f32 to vector<1x128xf32>
    %139 = arith.addf %138, %137 : vector<1x128xf32>
    %140 = arith.divf %138, %139 : vector<1x128xf32>
    %141 = vector.extract_strided_slice %132 {offsets = [0, 128], sizes = [1, 128], strides = [1, 1]} : vector<1x384xf32> to vector<1x128xf32>
    %142 = vector.extract_strided_slice %131 {offsets = [0, 128], sizes = [1, 128], strides = [1, 1]} : vector<1x384xf32> to vector<1x128xf32>
    %143 = arith.addf %141, %142 : vector<1x128xf32>
    %144 = arith.negf %143 : vector<1x128xf32>
    %145 = math.exp %144 : vector<1x128xf32>
    %cst_37 = arith.constant 1.000000e+00 : f32
    %146 = vector.broadcast %cst_37 : f32 to vector<1x128xf32>
    %147 = arith.addf %146, %145 : vector<1x128xf32>
    %148 = arith.divf %146, %147 : vector<1x128xf32>
    %149 = vector.extract_strided_slice %132 {offsets = [0, 256], sizes = [1, 128], strides = [1, 1]} : vector<1x384xf32> to vector<1x128xf32>
    %150 = vector.extract_strided_slice %131 {offsets = [0, 256], sizes = [1, 128], strides = [1, 1]} : vector<1x384xf32> to vector<1x128xf32>
    %151 = arith.addf %150, %4 : vector<1x128xf32>
    %152 = arith.mulf %140, %151 : vector<1x128xf32>
    %153 = arith.addf %149, %152 : vector<1x128xf32>
    %154 = math.tanh %153 : vector<1x128xf32>
    %cst_38 = arith.constant 1.000000e+00 : f32
    %155 = vector.broadcast %cst_38 : f32 to vector<1x128xf32>
    %156 = arith.subf %155, %148 : vector<1x128xf32>
    %157 = arith.mulf %156, %154 : vector<1x128xf32>
    %158 = arith.mulf %148, %128 : vector<1x128xf32>
    %159 = arith.addf %157, %158 : vector<1x128xf32>
    %c4_39 = arith.constant 4 : index
    %c0_40 = arith.constant 0 : index
    %160 = vector.load %arg5[%c4_39, %c0_40] : memref<8x128xf32, #tpu.memory_space<vmem>>, vector<1x128xf32>
    tpu.vector_store %arg5[%c4_39, %c0_40], %159 {strides = array<i32>} : memref<8x128xf32, #tpu.memory_space<vmem>>, vector<1x128xf32>,
    %161 = arith.truncf %159 : vector<1x128xf32> to vector<1x128xbf16>
    %cst_41 = arith.constant dense<0.000000e+00> : vector<1x384xf32>
    %162 = tpu.matmul %161, %3, %cst_41 {dimension_numbers = #tpu.dot_dimension_numbers<[1], [0], [0], [1], [0, 0, 1, 1], [], []>} : vector<1x128xbf16>, vector<128x384xbf16>, vector<1x384xf32> -> vector<1x384xf32>
    %c5 = arith.constant 5 : index
    %c0_42 = arith.constant 0 : index
    %163 = vector.load %arg1[%c5, %c0_42] : memref<8x384xf32, #tpu.memory_space<vmem>>, vector<1x384xf32>
    %164 = vector.extract_strided_slice %163 {offsets = [0, 0], sizes = [1, 128], strides = [1, 1]} : vector<1x384xf32> to vector<1x128xf32>
    %165 = vector.extract_strided_slice %162 {offsets = [0, 0], sizes = [1, 128], strides = [1, 1]} : vector<1x384xf32> to vector<1x128xf32>
    %166 = arith.addf %164, %165 : vector<1x128xf32>
    %167 = arith.negf %166 : vector<1x128xf32>
    %168 = math.exp %167 : vector<1x128xf32>
    %cst_43 = arith.constant 1.000000e+00 : f32
    %169 = vector.broadcast %cst_43 : f32 to vector<1x128xf32>
    %170 = arith.addf %169, %168 : vector<1x128xf32>
    %171 = arith.divf %169, %170 : vector<1x128xf32>
    %172 = vector.extract_strided_slice %163 {offsets = [0, 128], sizes = [1, 128], strides = [1, 1]} : vector<1x384xf32> to vector<1x128xf32>
    %173 = vector.extract_strided_slice %162 {offsets = [0, 128], sizes = [1, 128], strides = [1, 1]} : vector<1x384xf32> to vector<1x128xf32>
    %174 = arith.addf %172, %173 : vector<1x128xf32>
    %175 = arith.negf %174 : vector<1x128xf32>
    %176 = math.exp %175 : vector<1x128xf32>
    %cst_44 = arith.constant 1.000000e+00 : f32
    %177 = vector.broadcast %cst_44 : f32 to vector<1x128xf32>
    %178 = arith.addf %177, %176 : vector<1x128xf32>
    %179 = arith.divf %177, %178 : vector<1x128xf32>
    %180 = vector.extract_strided_slice %163 {offsets = [0, 256], sizes = [1, 128], strides = [1, 1]} : vector<1x384xf32> to vector<1x128xf32>
    %181 = vector.extract_strided_slice %162 {offsets = [0, 256], sizes = [1, 128], strides = [1, 1]} : vector<1x384xf32> to vector<1x128xf32>
    %182 = arith.addf %181, %4 : vector<1x128xf32>
    %183 = arith.mulf %171, %182 : vector<1x128xf32>
    %184 = arith.addf %180, %183 : vector<1x128xf32>
    %185 = math.tanh %184 : vector<1x128xf32>
    %cst_45 = arith.constant 1.000000e+00 : f32
    %186 = vector.broadcast %cst_45 : f32 to vector<1x128xf32>
    %187 = arith.subf %186, %179 : vector<1x128xf32>
    %188 = arith.mulf %187, %185 : vector<1x128xf32>
    %189 = arith.mulf %179, %159 : vector<1x128xf32>
    %190 = arith.addf %188, %189 : vector<1x128xf32>
    %c5_46 = arith.constant 5 : index
    %c0_47 = arith.constant 0 : index
    %191 = vector.load %arg5[%c5_46, %c0_47] : memref<8x128xf32, #tpu.memory_space<vmem>>, vector<1x128xf32>
    tpu.vector_store %arg5[%c5_46, %c0_47], %190 {strides = array<i32>} : memref<8x128xf32, #tpu.memory_space<vmem>>, vector<1x128xf32>,
    %192 = arith.truncf %190 : vector<1x128xf32> to vector<1x128xbf16>
    %cst_48 = arith.constant dense<0.000000e+00> : vector<1x384xf32>
    %193 = tpu.matmul %192, %3, %cst_48 {dimension_numbers = #tpu.dot_dimension_numbers<[1], [0], [0], [1], [0, 0, 1, 1], [], []>} : vector<1x128xbf16>, vector<128x384xbf16>, vector<1x384xf32> -> vector<1x384xf32>
    %c6 = arith.constant 6 : index
    %c0_49 = arith.constant 0 : index
    %194 = vector.load %arg1[%c6, %c0_49] : memref<8x384xf32, #tpu.memory_space<vmem>>, vector<1x384xf32>
    %195 = vector.extract_strided_slice %194 {offsets = [0, 0], sizes = [1, 128], strides = [1, 1]} : vector<1x384xf32> to vector<1x128xf32>
    %196 = vector.extract_strided_slice %193 {offsets = [0, 0], sizes = [1, 128], strides = [1, 1]} : vector<1x384xf32> to vector<1x128xf32>
    %197 = arith.addf %195, %196 : vector<1x128xf32>
    %198 = arith.negf %197 : vector<1x128xf32>
    %199 = math.exp %198 : vector<1x128xf32>
    %cst_50 = arith.constant 1.000000e+00 : f32
    %200 = vector.broadcast %cst_50 : f32 to vector<1x128xf32>
    %201 = arith.addf %200, %199 : vector<1x128xf32>
    %202 = arith.divf %200, %201 : vector<1x128xf32>
    %203 = vector.extract_strided_slice %194 {offsets = [0, 128], sizes = [1, 128], strides = [1, 1]} : vector<1x384xf32> to vector<1x128xf32>
    %204 = vector.extract_strided_slice %193 {offsets = [0, 128], sizes = [1, 128], strides = [1, 1]} : vector<1x384xf32> to vector<1x128xf32>
    %205 = arith.addf %203, %204 : vector<1x128xf32>
    %206 = arith.negf %205 : vector<1x128xf32>
    %207 = math.exp %206 : vector<1x128xf32>
    %cst_51 = arith.constant 1.000000e+00 : f32
    %208 = vector.broadcast %cst_51 : f32 to vector<1x128xf32>
    %209 = arith.addf %208, %207 : vector<1x128xf32>
    %210 = arith.divf %208, %209 : vector<1x128xf32>
    %211 = vector.extract_strided_slice %194 {offsets = [0, 256], sizes = [1, 128], strides = [1, 1]} : vector<1x384xf32> to vector<1x128xf32>
    %212 = vector.extract_strided_slice %193 {offsets = [0, 256], sizes = [1, 128], strides = [1, 1]} : vector<1x384xf32> to vector<1x128xf32>
    %213 = arith.addf %212, %4 : vector<1x128xf32>
    %214 = arith.mulf %202, %213 : vector<1x128xf32>
    %215 = arith.addf %211, %214 : vector<1x128xf32>
    %216 = math.tanh %215 : vector<1x128xf32>
    %cst_52 = arith.constant 1.000000e+00 : f32
    %217 = vector.broadcast %cst_52 : f32 to vector<1x128xf32>
    %218 = arith.subf %217, %210 : vector<1x128xf32>
    %219 = arith.mulf %218, %216 : vector<1x128xf32>
    %220 = arith.mulf %210, %190 : vector<1x128xf32>
    %221 = arith.addf %219, %220 : vector<1x128xf32>
    %c6_53 = arith.constant 6 : index
    %c0_54 = arith.constant 0 : index
    %222 = vector.load %arg5[%c6_53, %c0_54] : memref<8x128xf32, #tpu.memory_space<vmem>>, vector<1x128xf32>
    tpu.vector_store %arg5[%c6_53, %c0_54], %221 {strides = array<i32>} : memref<8x128xf32, #tpu.memory_space<vmem>>, vector<1x128xf32>,
    %223 = arith.truncf %221 : vector<1x128xf32> to vector<1x128xbf16>
    %cst_55 = arith.constant dense<0.000000e+00> : vector<1x384xf32>
    %224 = tpu.matmul %223, %3, %cst_55 {dimension_numbers = #tpu.dot_dimension_numbers<[1], [0], [0], [1], [0, 0, 1, 1], [], []>} : vector<1x128xbf16>, vector<128x384xbf16>, vector<1x384xf32> -> vector<1x384xf32>
    %c7 = arith.constant 7 : index
    %c0_56 = arith.constant 0 : index
    %225 = vector.load %arg1[%c7, %c0_56] : memref<8x384xf32, #tpu.memory_space<vmem>>, vector<1x384xf32>
    %226 = vector.extract_strided_slice %225 {offsets = [0, 0], sizes = [1, 128], strides = [1, 1]} : vector<1x384xf32> to vector<1x128xf32>
    %227 = vector.extract_strided_slice %224 {offsets = [0, 0], sizes = [1, 128], strides = [1, 1]} : vector<1x384xf32> to vector<1x128xf32>
    %228 = arith.addf %226, %227 : vector<1x128xf32>
    %229 = arith.negf %228 : vector<1x128xf32>
    %230 = math.exp %229 : vector<1x128xf32>
    %cst_57 = arith.constant 1.000000e+00 : f32
    %231 = vector.broadcast %cst_57 : f32 to vector<1x128xf32>
    %232 = arith.addf %231, %230 : vector<1x128xf32>
    %233 = arith.divf %231, %232 : vector<1x128xf32>
    %234 = vector.extract_strided_slice %225 {offsets = [0, 128], sizes = [1, 128], strides = [1, 1]} : vector<1x384xf32> to vector<1x128xf32>
    %235 = vector.extract_strided_slice %224 {offsets = [0, 128], sizes = [1, 128], strides = [1, 1]} : vector<1x384xf32> to vector<1x128xf32>
    %236 = arith.addf %234, %235 : vector<1x128xf32>
    %237 = arith.negf %236 : vector<1x128xf32>
    %238 = math.exp %237 : vector<1x128xf32>
    %cst_58 = arith.constant 1.000000e+00 : f32
    %239 = vector.broadcast %cst_58 : f32 to vector<1x128xf32>
    %240 = arith.addf %239, %238 : vector<1x128xf32>
    %241 = arith.divf %239, %240 : vector<1x128xf32>
    %242 = vector.extract_strided_slice %225 {offsets = [0, 256], sizes = [1, 128], strides = [1, 1]} : vector<1x384xf32> to vector<1x128xf32>
    %243 = vector.extract_strided_slice %224 {offsets = [0, 256], sizes = [1, 128], strides = [1, 1]} : vector<1x384xf32> to vector<1x128xf32>
    %244 = arith.addf %243, %4 : vector<1x128xf32>
    %245 = arith.mulf %233, %244 : vector<1x128xf32>
    %246 = arith.addf %242, %245 : vector<1x128xf32>
    %247 = math.tanh %246 : vector<1x128xf32>
    %cst_59 = arith.constant 1.000000e+00 : f32
    %248 = vector.broadcast %cst_59 : f32 to vector<1x128xf32>
    %249 = arith.subf %248, %241 : vector<1x128xf32>
    %250 = arith.mulf %249, %247 : vector<1x128xf32>
    %251 = arith.mulf %241, %221 : vector<1x128xf32>
    %252 = arith.addf %250, %251 : vector<1x128xf32>
    %c7_60 = arith.constant 7 : index
    %c0_61 = arith.constant 0 : index
    %253 = vector.load %arg5[%c7_60, %c0_61] : memref<8x128xf32, #tpu.memory_space<vmem>>, vector<1x128xf32>
    tpu.vector_store %arg5[%c7_60, %c0_61], %252 {strides = array<i32>} : memref<8x128xf32, #tpu.memory_space<vmem>>, vector<1x128xf32>,
    %c0_62 = arith.constant 0 : index
    %c0_63 = arith.constant 0 : index
    %254 = vector.load %arg6[%c0_62, %c0_63] : memref<1x128xf32, #tpu.memory_space<vmem>>, vector<1x128xf32>
    tpu.vector_store %arg6[%c0_62, %c0_63], %252 {strides = array<i32>} : memref<1x128xf32, #tpu.memory_space<vmem>>, vector<1x128xf32>,
    return
  }
  func.func @transform_0(%arg0: i32) -> (i32, i32) {
    %c0_i32 = arith.constant 0 : i32
    %c0_i32_0 = arith.constant 0 : i32
    return %arg0, %c0_i32 : i32, i32
  }
  func.func @transform_1(%arg0: i32) -> (i32, i32) {
    %c0_i32 = arith.constant 0 : i32
    %c0_i32_0 = arith.constant 0 : i32
    %c0_i32_1 = arith.constant 0 : i32
    return %c0_i32, %c0_i32_0 : i32, i32
  }
  func.func @transform_2(%arg0: i32) -> (i32, i32) {
    %c0_i32 = arith.constant 0 : i32
    %c0_i32_0 = arith.constant 0 : i32
    %c0_i32_1 = arith.constant 0 : i32
    return %c0_i32, %c0_i32_0 : i32, i32
  }
  func.func @transform_3(%arg0: i32) -> (i32, i32) {
    %c0_i32 = arith.constant 0 : i32
    %c0_i32_0 = arith.constant 0 : i32
    %c0_i32_1 = arith.constant 0 : i32
    return %c0_i32, %c0_i32_0 : i32, i32
  }
  func.func @transform_4(%arg0: i32) -> (i32, i32) {
    %c0_i32 = arith.constant 0 : i32
    %c0_i32_0 = arith.constant 0 : i32
    return %arg0, %c0_i32 : i32, i32
  }
}

</mosaic_0001>

<llo_original>
// kernel: tpu_custom_call.1
$region0: #{tpu_custom_call.1}
  #allocation0 [shape = 'u32[]', space=smem, size = 0x4, offset = 0x4, fixed_abs, tag = 'smem constant byte address 0x4 - core index']
  #allocation1 [shape = 'u32[144,128]{1,0:T(1,128)}', space=vmem, size = 0x12000, scoped, tag = 'internal scratch']
  #allocation2 [shape = 'f32[1,128]{1,0:T(1,128)}', space=vmem, size = 0x200, scoped, tag = 'scratch operand']
  %s0 = inlined_call_operand.hbm [shape: f32[8,384], index: 0, kind: input, shape index: {}]
  %s1 = inlined_call_operand.vmem [shape: f32[1,128], index: 1, kind: input, shape index: {}]
  %s2 = inlined_call_operand.hbm [shape: bf16[128,384], index: 2, kind: input, shape index: {}]
  %s3 = inlined_call_operand.vmem [shape: f32[1,128], index: 3, kind: input, shape index: {}]
  %s4 = inlined_call_operand.hbm [shape: f32[8,128], index: 4, kind: output, shape index: {}]
  %s5 = sld [smem:[#allocation0]]
  $region38: #{tpu_custom_call.1} parent=0
    _
  %s7 = ssub.s32 1, %s5
  %s8 = scalar_select 0, %s7, %s5
  $region1: #{tpu_custom_call.1} parent=0
    #allocation3 [shape = 'u8[12288]{0}', space=vmem, size = 0x3000, scoped, tag = 'input window, operand 0, single buffered']
    #allocation4 [shape = 's32[1]{0}', space=sflag, size = 0x4, scoped, tag = 'scoped memory for tpu_custom_call.1']
    #allocation5 [shape = 's32[1]{0}', space=sflag, size = 0x4, scoped, tag = 'scoped memory for tpu_custom_call.1']
    #allocation6 [shape = 'u8[98304]{0}', space=vmem, size = 0x18000, scoped, tag = 'input window, operand 2, single buffered']
    #allocation7 [shape = 's32[1]{0}', space=sflag, size = 0x4, scoped, tag = 'scoped memory for tpu_custom_call.1']
    #allocation8 [shape = 'u8[4096]{0}', space=vmem, size = 0x1000, scoped, tag = 'output window, operand 0, single buffered']
    %9 = vsyncpa [#allocation4], 0
    %10 = vsyncpa [#allocation7], 0
    %11 = vsyncpa [#allocation5], 0
    // Predicated region
    $region2: #{tpu_custom_call.1} parent=1 // pred_check
      _
    $region3: #{tpu_custom_call.1} parent=1 // pred_check_branch
      %13 = sbr.rel (0) target = $region5
    $region4: #{tpu_custom_call.1} parent=1 // pred_region
      %s15 = ssub.s32 384, 384
      %16 = vsyncadd [#allocation4], %s15
      %s18 = sshll.u32 [#allocation3], 4
      %s19 = int_to_ptr.vmem [resolvable:$true] %s18
      %21 = dma.hbm_to_vmem [thread:$0]  %s0, 384, %s19, [#allocation4]
    $region5: #{tpu_custom_call.1} parent=1 // pred_fallthru
      _
    // Predicated region
    $region6: #{tpu_custom_call.1} parent=1 // pred_check
      _
    $region7: #{tpu_custom_call.1} parent=1 // pred_check_branch
      %23 = sbr.rel (0) target = $region9
    $region8: #{tpu_custom_call.1} parent=1 // pred_region
      _
    $region9: #{tpu_custom_call.1} parent=1 // pred_fallthru
      _
    // Predicated region
    $region10: #{tpu_custom_call.1} parent=1 // pred_check
      _
    $region11: #{tpu_custom_call.1} parent=1 // pred_check_branch
      %25 = sbr.rel (0) target = $region13
    $region12: #{tpu_custom_call.1} parent=1 // pred_region
      %s27 = ssub.s32 3072, 3072
      %28 = vsyncadd [#allocation7], %s27
      %s29 = sshll.u32 [#allocation6], 4
      %s30 = int_to_ptr.vmem [resolvable:$true] %s29
      %35 = dma.hbm_to_vmem [thread:$0]  %s2, 3072, %s30, [#allocation7], 192, 192, 12
    $region13: #{tpu_custom_call.1} parent=1 // pred_fallthru
      _
    // Predicated region
    $region14: #{tpu_custom_call.1} parent=1 // pred_check
      _
    $region15: #{tpu_custom_call.1} parent=1 // pred_check_branch
      %37 = sbr.rel (0) target = $region17
    $region16: #{tpu_custom_call.1} parent=1 // pred_region
      _
    $region17: #{tpu_custom_call.1} parent=1 // pred_fallthru
      _
    // Predicated region
    $region18: #{tpu_custom_call.1} parent=1 // pred_check
      _
    $region19: #{tpu_custom_call.1} parent=1 // pred_check_branch
      %39 = sbr.rel (0) target = $region21
    $region20: #{tpu_custom_call.1} parent=1 // pred_region
      %40 = dma.done [#allocation4], 384
    $region21: #{tpu_custom_call.1} parent=1 // pred_fallthru
      _
    // Predicated region
    $region22: #{tpu_custom_call.1} parent=1 // pred_check
      _
    $region23: #{tpu_custom_call.1} parent=1 // pred_check_branch
      %42 = sbr.rel (0) target = $region25
    $region24: #{tpu_custom_call.1} parent=1 // pred_region
      %43 = dma.done [#allocation7], 3072
    $region25: #{tpu_custom_call.1} parent=1 // pred_fallthru
      _
    %p45 = scmp.eq.s32.totalorder 0, 0
    // Predicated region
    $region26: #{tpu_custom_call.1} parent=1 // pred_check
      %p46 = pneg %p45
    $region27: #{tpu_custom_call.1} parent=1 // pred_check_branch
      %48 = sbr.rel (%p46) target = $region29
    $region28: #{tpu_custom_call.1} parent=1 // pred_region
      %v49 = vld [vmem:[%s1] sm:$0x1]
      %50 = vst [vmem:[#allocation2] sm:$0x1] %v49
    $region29: #{tpu_custom_call.1} parent=1 // pred_fallthru
      _
    %v51 = vld [vmem:[#allocation6] sm:$0xff]
    %v52 = vld [vmem:[#allocation6 + $0x8] sm:$0xf]
    %v53 = vld [vmem:[#allocation6 + $0xc] sm:$0xff]
    %v54 = vld [vmem:[#allocation6 + $0x14] sm:$0xf]
    %v55 = vld [vmem:[#allocation6 + $0x18] sm:$0xff]
    %v56 = vld [vmem:[#allocation6 + $0x20] sm:$0xf]
    %v57 = vld [vmem:[#allocation6 + $0x24] sm:$0xff]
    %v58 = vld [vmem:[#allocation6 + $0x2c] sm:$0xf]
    %v59 = vld [vmem:[#allocation6 + $0x30] sm:$0xff]
    %v60 = vld [vmem:[#allocation6 + $0x38] sm:$0xf]
    %v61 = vld [vmem:[#allocation6 + $0x3c] sm:$0xff]
    %v62 = vld [vmem:[#allocation6 + $0x44] sm:$0xf]
    %v63 = vld [vmem:[#allocation6 + $0x48] sm:$0xff]
    %v64 = vld [vmem:[#allocation6 + $0x50] sm:$0xf]
    %v65 = vld [vmem:[#allocation6 + $0x54] sm:$0xff]
    %v66 = vld [vmem:[#allocation6 + $0x5c] sm:$0xf]
    %v67 = vld [vmem:[#allocation6 + $0x60] sm:$0xff]
    %v68 = vld [vmem:[#allocation6 + $0x68] sm:$0xf]
    %v69 = vld [vmem:[#allocation6 + $0x6c] sm:$0xff]
    %v70 = vld [vmem:[#allocation6 + $0x74] sm:$0xf]
    %v71 = vld [vmem:[#allocation6 + $0x78] sm:$0xff]
    %v72 = vld [vmem:[#allocation6 + $0x80] sm:$0xf]
    %v73 = vld [vmem:[#allocation6 + $0x84] sm:$0xff]
    %v74 = vld [vmem:[#allocation6 + $0x8c] sm:$0xf]
    %v75 = vld [vmem:[#allocation6 + $0x90] sm:$0xff]
    %v76 = vld [vmem:[#allocation6 + $0x98] sm:$0xf]
    %v77 = vld [vmem:[#allocation6 + $0x9c] sm:$0xff]
    %v78 = vld [vmem:[#allocation6 + $0xa4] sm:$0xf]
    %v79 = vld [vmem:[#allocation6 + $0xa8] sm:$0xff]
    %v80 = vld [vmem:[#allocation6 + $0xb0] sm:$0xf]
    %v81 = vld [vmem:[#allocation6 + $0xb4] sm:$0xff]
    %v82 = vld [vmem:[#allocation6 + $0xbc] sm:$0xf]
    %v83 = vld [vmem:[%s3] sm:$0x1]
    %v84 = vld [vmem:[#allocation2] sm:$0x1]
    %v85 = vpack.c.bf16 %v84, %v84
    %v118 = vunpack.c.l.b16 %v51
    %v119 = vunpack.c.h.b16 %v51
    %v120 = vunpack.c.l.b16 %v52
    %v121 = vunpack.c.l.b16 %v53
    %v122 = vunpack.c.h.b16 %v53
    %v123 = vunpack.c.l.b16 %v54
    %v124 = vunpack.c.l.b16 %v55
    %v125 = vunpack.c.h.b16 %v55
    %v126 = vunpack.c.l.b16 %v56
    %v127 = vunpack.c.l.b16 %v57
    %v128 = vunpack.c.h.b16 %v57
    %v129 = vunpack.c.l.b16 %v58
    %v130 = vunpack.c.l.b16 %v59
    %v131 = vunpack.c.h.b16 %v59
    %v132 = vunpack.c.l.b16 %v60
    %v133 = vunpack.c.l.b16 %v61
    %v134 = vunpack.c.h.b16 %v61
    %v135 = vunpack.c.l.b16 %v62
    %v136 = vunpack.c.l.b16 %v63
    %v137 = vunpack.c.h.b16 %v63
    %v138 = vunpack.c.l.b16 %v64
    %v139 = vunpack.c.l.b16 %v65
    %v140 = vunpack.c.h.b16 %v65
    %v141 = vunpack.c.l.b16 %v66
    %v142 = vunpack.c.l.b16 %v67
    %v143 = vunpack.c.h.b16 %v67
    %v144 = vunpack.c.l.b16 %v68
    %v145 = vunpack.c.l.b16 %v69
    %v146 = vunpack.c.h.b16 %v69
    %v147 = vunpack.c.l.b16 %v70
    %v148 = vunpack.c.l.b16 %v71
    %v149 = vunpack.c.h.b16 %v71
    %v150 = vunpack.c.l.b16 %v72
    %v151 = vunpack.c.l.b16 %v73
    %v152 = vunpack.c.h.b16 %v73
    %v153 = vunpack.c.l.b16 %v74
    %v154 = vunpack.c.l.b16 %v75
    %v155 = vunpack.c.h.b16 %v75
    %v156 = vunpack.c.l.b16 %v76
    %v157 = vunpack.c.l.b16 %v77
    %v158 = vunpack.c.h.b16 %v77
    %v159 = vunpack.c.l.b16 %v78
    %v160 = vunpack.c.l.b16 %v79
    %v161 = vunpack.c.h.b16 %v79
    %v162 = vunpack.c.l.b16 %v80
    %v163 = vunpack.c.l.b16 %v81
    %v164 = vunpack.c.h.b16 %v81
    %v165 = vunpack.c.l.b16 %v82
    %v166 = vpack.c.b16 %v121, %v118
    %v167 = vpack.c.b16 %v122, %v119
    %v168 = vpack.c.b16 %v123, %v120
    %v169 = vpack.c.b16 %v127, %v124
    %v170 = vpack.c.b16 %v128, %v125
    %v171 = vpack.c.b16 %v129, %v126
    %v172 = vpack.c.b16 %v133, %v130
    %v173 = vpack.c.b16 %v134, %v131
    %v174 = vpack.c.b16 %v135, %v132
    %v175 = vpack.c.b16 %v139, %v136
    %v176 = vpack.c.b16 %v140, %v137
    %v177 = vpack.c.b16 %v141, %v138
    %v178 = vpack.c.b16 %v145, %v142
    %v179 = vpack.c.b16 %v146, %v143
    %v180 = vpack.c.b16 %v147, %v144
    %v181 = vpack.c.b16 %v151, %v148
    %v182 = vpack.c.b16 %v152, %v149
    %v183 = vpack.c.b16 %v153, %v150
    %v184 = vpack.c.b16 %v157, %v154
    %v185 = vpack.c.b16 %v158, %v155
    %v186 = vpack.c.b16 %v159, %v156
    %v187 = vpack.c.b16 %v163, %v160
    %v188 = vpack.c.b16 %v164, %v161
    %v189 = vpack.c.b16 %v165, %v162
    %214 = vmatprep.subr.bf16.mxu0 %v167
    %215 = vmatpush1.bf16.msra.mxu0 %v166
    %216 = vmatprep.subr.bf16.mxu0 %v170
    %217 = vmatpush1.bf16.msra.mxu0 %v169
    %218 = vmatprep.subr.bf16.mxu0 %v173
    %219 = vmatpush1.bf16.msra.mxu0 %v172
    %220 = vmatprep.subr.bf16.mxu0 %v176
    %221 = vmatpush1.bf16.msra.mxu0 %v175
    %222 = vmatprep.subr.bf16.mxu0 %v179
    %223 = vmatpush1.bf16.msra.mxu0 %v178
    %224 = vmatprep.subr.bf16.mxu0 %v182
    %225 = vmatpush1.bf16.msra.mxu0 %v181
    %226 = vmatprep.subr.bf16.mxu0 %v185
    %227 = vmatpush1.bf16.msra.mxu0 %v184
    %228 = vmatprep.subr.bf16.mxu0 %v188
    %229 = vmatpush1.bf16.msra.mxu0 %v187
    %230 = vmatprep.subr.bf16.mxu0 0
    %231 = vmatpush1.bf16.msra.mxu0 0
    %232 = vmatprep.subr.bf16.mxu0 0
    %233 = vmatpush1.bf16.msra.mxu0 0
    %234 = vmatprep.subr.bf16.mxu0 0
    %235 = vmatpush1.bf16.msra.mxu0 0
    %236 = vmatprep.subr.bf16.mxu0 0
    %237 = vmatpush1.bf16.msra.mxu0 0
    %238 = vmatprep.subr.bf16.mxu0 0
    %239 = vmatpush1.bf16.msra.mxu0 0
    %240 = vmatprep.subr.bf16.mxu0 0
    %241 = vmatpush1.bf16.msra.mxu0 0
    %242 = vmatprep.subr.bf16.mxu0 0
    %243 = vmatpush1.bf16.msra.mxu0 0
    %244 = vmatprep.subr.bf16.mxu0 0
    %245 = vmatpush1.bf16.msra.mxu0 0
    %246 = vmatprep.mubr.bf16.mxu0 0
    %247 = vmatmul.mubr.bf16.gmra.mrb[0].mxu0 %v85
    %v248 = vpop.f32.mrb[0].mxu0
    %v249 = vadd.f32 0.0, %v248
    %v250 = vpop.f32.mrb[0].mxu0
    %v251 = vadd.f32 0.0, %v250
    %v252 = vpop.f32.mrb[0].mxu0
    %v253 = vpop.f32.mrb[0].mxu0
    %254 = vdwg.mxu0
    %255 = vmatprep.subr.bf16.mxu0 0
    %256 = vmatpush1.bf16.msra.mxu0 %v168
    %257 = vmatprep.subr.bf16.mxu0 0
    %258 = vmatpush1.bf16.msra.mxu0 %v171
    %259 = vmatprep.subr.bf16.mxu0 0
    %260 = vmatpush1.bf16.msra.mxu0 %v174
    %261 = vmatprep.subr.bf16.mxu0 0
    %262 = vmatpush1.bf16.msra.mxu0 %v177
    %263 = vmatprep.subr.bf16.mxu0 0
    %264 = vmatpush1.bf16.msra.mxu0 %v180
    %265 = vmatprep.subr.bf16.mxu0 0
    %266 = vmatpush1.bf16.msra.mxu0 %v183
    %267 = vmatprep.subr.bf16.mxu0 0
    %268 = vmatpush1.bf16.msra.mxu0 %v186
    %269 = vmatprep.subr.bf16.mxu0 0
    %270 = vmatpush1.bf16.msra.mxu0 %v189
    %271 = vmatprep.subr.bf16.mxu0 0
    %272 = vmatpush1.bf16.msra.mxu0 0
    %273 = vmatprep.subr.bf16.mxu0 0
    %274 = vmatpush1.bf16.msra.mxu0 0
    %275 = vmatprep.subr.bf16.mxu0 0
    %276 = vmatpush1.bf16.msra.mxu0 0
    %277 = vmatprep.subr.bf16.mxu0 0
    %278 = vmatpush1.bf16.msra.mxu0 0
    %279 = vmatprep.subr.bf16.mxu0 0
    %280 = vmatpush1.bf16.msra.mxu0 0
    %281 = vmatprep.subr.bf16.mxu0 0
    %282 = vmatpush1.bf16.msra.mxu0 0
    %283 = vmatprep.subr.bf16.mxu0 0
    %284 = vmatpush1.bf16.msra.mxu0 0
    %285 = vmatprep.subr.bf16.mxu0 0
    %286 = vmatpush1.bf16.msra.mxu0 0
    %287 = vmatprep.mubr.bf16.mxu0 0
    %288 = vmatmul.mubr.bf16.gmra.mrb[0].mxu0 %v85
    %v289 = vpop.f32.mrb[0].mxu0
    %v290 = vadd.f32 0.0, %v289
    %v291 = vpop.f32.mrb[0].mxu0
    %v292 = vpop.f32.mrb[0].mxu0
    %v293 = vpop.f32.mrb[0].mxu0
    %294 = vdwg.mxu0
    %v295 = vld [vmem:[#allocation3] ss:$8 sm:$0x7]
    %v296 = vadd.f32 %v295, %v249
    %v297 = vxor.u32 %v296, 2147483648
    %v298 = vmul.f32 %v297, 1.442695
    %v299 = vpow.pop %v298
    %v300 = vadd.f32 %v299, 1.0
    %v301 = vrcp.pop %v300
    %v302 = vmul.f32 1.0, %v301
    %v304 = vrot.slane %v295, 1
    %v306 = vadd.f32 %v304, %v251
    %v307 = vxor.u32 %v306, 2147483648
    %v308 = vmul.f32 %v307, 1.442695
    %v309 = vpow.pop %v308
    %v310 = vadd.f32 %v309, 1.0
    %v311 = vrcp.pop %v310
    %v312 = vmul.f32 1.0, %v311
    %v313 = vadd.f32 %v290, %v83
    %v314 = vmul.f32 %v302, %v313
    %v315 = vrot.slane %v295, 2
    %v317 = vadd.f32 %v315, %v314
    %v318 = vtanh.pop %v317
    %v319 = vsub.f32 1.0, %v312
    %v320 = vmul.f32 %v319, %v318
    %v321 = vmul.f32 %v312, %v84
    %v322 = vadd.f32 %v320, %v321
    %323 = vst [vmem:[#allocation8] sm:$0x1] %v322
    %v324 = vpack.c.bf16 %v322, %v322
    %325 = vmatprep.subr.bf16.mxu0 %v167
    %326 = vmatpush1.bf16.msra.mxu0 %v166
    %327 = vmatprep.subr.bf16.mxu0 %v170
    %328 = vmatpush1.bf16.msra.mxu0 %v169
    %329 = vmatprep.subr.bf16.mxu0 %v173
    %330 = vmatpush1.bf16.msra.mxu0 %v172
    %331 = vmatprep.subr.bf16.mxu0 %v176
    %332 = vmatpush1.bf16.msra.mxu0 %v175
    %333 = vmatprep.subr.bf16.mxu0 %v179
    %334 = vmatpush1.bf16.msra.mxu0 %v178
    %335 = vmatprep.subr.bf16.mxu0 %v182
    %336 = vmatpush1.bf16.msra.mxu0 %v181
    %337 = vmatprep.subr.bf16.mxu0 %v185
    %338 = vmatpush1.bf16.msra.mxu0 %v184
    %339 = vmatprep.subr.bf16.mxu0 %v188
    %340 = vmatpush1.bf16.msra.mxu0 %v187
    %341 = vmatprep.subr.bf16.mxu0 0
    %342 = vmatpush1.bf16.msra.mxu0 0
    %343 = vmatprep.subr.bf16.mxu0 0
    %344 = vmatpush1.bf16.msra.mxu0 0
    %345 = vmatprep.subr.bf16.mxu0 0
    %346 = vmatpush1.bf16.msra.mxu0 0
    %347 = vmatprep.subr.bf16.mxu0 0
    %348 = vmatpush1.bf16.msra.mxu0 0
    %349 = vmatprep.subr.bf16.mxu0 0
    %350 = vmatpush1.bf16.msra.mxu0 0
    %351 = vmatprep.subr.bf16.mxu0 0
    %352 = vmatpush1.bf16.msra.mxu0 0
    %353 = vmatprep.subr.bf16.mxu0 0
    %354 = vmatpush1.bf16.msra.mxu0 0
    %355 = vmatprep.subr.bf16.mxu0 0
    %356 = vmatpush1.bf16.msra.mxu0 0
    %357 = vmatprep.mubr.bf16.mxu0 0
    %358 = vmatmul.mubr.bf16.gmra.mrb[0].mxu0 %v324
    %v359 = vpop.f32.mrb[0].mxu0
    %v360 = vadd.f32 0.0, %v359
    %v361 = vpop.f32.mrb[0].mxu0
    %v362 = vadd.f32 0.0, %v361
    %v363 = vpop.f32.mrb[0].mxu0
    %v364 = vpop.f32.mrb[0].mxu0
    %365 = vdwg.mxu0
    %366 = vmatprep.subr.bf16.mxu0 0
    %367 = vmatpush1.bf16.msra.mxu0 %v168
    %368 = vmatprep.subr.bf16.mxu0 0
    %369 = vmatpush1.bf16.msra.mxu0 %v171
    %370 = vmatprep.subr.bf16.mxu0 0
    %371 = vmatpush1.bf16.msra.mxu0 %v174
    %372 = vmatprep.subr.bf16.mxu0 0
    %373 = vmatpush1.bf16.msra.mxu0 %v177
    %374 = vmatprep.subr.bf16.mxu0 0
    %375 = vmatpush1.bf16.msra.mxu0 %v180
    %376 = vmatprep.subr.bf16.mxu0 0
    %377 = vmatpush1.bf16.msra.mxu0 %v183
    %378 = vmatprep.subr.bf16.mxu0 0
    %379 = vmatpush1.bf16.msra.mxu0 %v186
    %380 = vmatprep.subr.bf16.mxu0 0
    %381 = vmatpush1.bf16.msra.mxu0 %v189
    %382 = vmatprep.subr.bf16.mxu0 0
    %383 = vmatpush1.bf16.msra.mxu0 0
    %384 = vmatprep.subr.bf16.mxu0 0
    %385 = vmatpush1.bf16.msra.mxu0 0
    %386 = vmatprep.subr.bf16.mxu0 0
    %387 = vmatpush1.bf16.msra.mxu0 0
    %388 = vmatprep.subr.bf16.mxu0 0
    %389 = vmatpush1.bf16.msra.mxu0 0
    %390 = vmatprep.subr.bf16.mxu0 0
    %391 = vmatpush1.bf16.msra.mxu0 0
    %392 = vmatprep.subr.bf16.mxu0 0
    %393 = vmatpush1.bf16.msra.mxu0 0
    %394 = vmatprep.subr.bf16.mxu0 0
    %395 = vmatpush1.bf16.msra.mxu0 0
    %396 = vmatprep.subr.bf16.mxu0 0
    %397 = vmatpush1.bf16.msra.mxu0 0
    %398 = vmatprep.mubr.bf16.mxu0 0
    %399 = vmatmul.mubr.bf16.gmra.mrb[0].mxu0 %v324
    %v400 = vpop.f32.mrb[0].mxu0
    %v401 = vadd.f32 0.0, %v400
    %v402 = vpop.f32.mrb[0].mxu0
    %v403 = vpop.f32.mrb[0].mxu0
    %v404 = vpop.f32.mrb[0].mxu0
    %405 = vdwg.mxu0
    %s406 = scalar_lea.vmem [#allocation3], 1
    %v407 = vld [vmem:[%s406] ss:$8 sm:$0x7]
    %v408 = vadd.f32 %v407, %v360
    %v409 = vxor.u32 %v408, 2147483648
    %v410 = vmul.f32 %v409, 1.442695
    %v411 = vpow.pop %v410
    %v412 = vadd.f32 %v411, 1.0
    %v413 = vrcp.pop %v412
    %v414 = vmul.f32 1.0, %v413
    %v416 = vrot.slane %v407, 1
    %v418 = vadd.f32 %v416, %v362
    %v419 = vxor.u32 %v418, 2147483648
    %v420 = vmul.f32 %v419, 1.442695
    %v421 = vpow.pop %v420
    %v422 = vadd.f32 %v421, 1.0
    %v423 = vrcp.pop %v422
    %v424 = vmul.f32 1.0, %v423
    %v425 = vadd.f32 %v401, %v83
    %v426 = vmul.f32 %v414, %v425
    %v427 = vrot.slane %v407, 2
    %v429 = vadd.f32 %v427, %v426
    %v430 = vtanh.pop %v429
    %v431 = vsub.f32 1.0, %v424
    %v432 = vmul.f32 %v431, %v430
    %v433 = vmul.f32 %v424, %v322
    %v434 = vadd.f32 %v432, %v433
    %435 = vst [vmem:[#allocation8 + $0x1] sm:$0x1] %v434
    %v436 = vpack.c.bf16 %v434, %v434
    %437 = vmatprep.subr.bf16.mxu0 %v167
    %438 = vmatpush1.bf16.msra.mxu0 %v166
    %439 = vmatprep.subr.bf16.mxu0 %v170
    %440 = vmatpush1.bf16.msra.mxu0 %v169
    %441 = vmatprep.subr.bf16.mxu0 %v173
    %442 = vmatpush1.bf16.msra.mxu0 %v172
    %443 = vmatprep.subr.bf16.mxu0 %v176
    %444 = vmatpush1.bf16.msra.mxu0 %v175
    %445 = vmatprep.subr.bf16.mxu0 %v179
    %446 = vmatpush1.bf16.msra.mxu0 %v178
    %447 = vmatprep.subr.bf16.mxu0 %v182
    %448 = vmatpush1.bf16.msra.mxu0 %v181
    %449 = vmatprep.subr.bf16.mxu0 %v185
    %450 = vmatpush1.bf16.msra.mxu0 %v184
    %451 = vmatprep.subr.bf16.mxu0 %v188
    %452 = vmatpush1.bf16.msra.mxu0 %v187
    %453 = vmatprep.subr.bf16.mxu0 0
    %454 = vmatpush1.bf16.msra.mxu0 0
    %455 = vmatprep.subr.bf16.mxu0 0
    %456 = vmatpush1.bf16.msra.mxu0 0
    %457 = vmatprep.subr.bf16.mxu0 0
    %458 = vmatpush1.bf16.msra.mxu0 0
    %459 = vmatprep.subr.bf16.mxu0 0
    %460 = vmatpush1.bf16.msra.mxu0 0
    %461 = vmatprep.subr.bf16.mxu0 0
    %462 = vmatpush1.bf16.msra.mxu0 0
    %463 = vmatprep.subr.bf16.mxu0 0
    %464 = vmatpush1.bf16.msra.mxu0 0
    %465 = vmatprep.subr.bf16.mxu0 0
    %466 = vmatpush1.bf16.msra.mxu0 0
    %467 = vmatprep.subr.bf16.mxu0 0
    %468 = vmatpush1.bf16.msra.mxu0 0
    %469 = vmatprep.mubr.bf16.mxu0 0
    %470 = vmatmul.mubr.bf16.gmra.mrb[0].mxu0 %v436
    %v471 = vpop.f32.mrb[0].mxu0
    %v472 = vadd.f32 0.0, %v471
    %v473 = vpop.f32.mrb[0].mxu0
    %v474 = vadd.f32 0.0, %v473
    %v475 = vpop.f32.mrb[0].mxu0
    %v476 = vpop.f32.mrb[0].mxu0
    %477 = vdwg.mxu0
    %478 = vmatprep.subr.bf16.mxu0 0
    %479 = vmatpush1.bf16.msra.mxu0 %v168
    %480 = vmatprep.subr.bf16.mxu0 0
    %481 = vmatpush1.bf16.msra.mxu0 %v171
    %482 = vmatprep.subr.bf16.mxu0 0
    %483 = vmatpush1.bf16.msra.mxu0 %v174
    %484 = vmatprep.subr.bf16.mxu0 0
    %485 = vmatpush1.bf16.msra.mxu0 %v177
    %486 = vmatprep.subr.bf16.mxu0 0
    %487 = vmatpush1.bf16.msra.mxu0 %v180
    %488 = vmatprep.subr.bf16.mxu0 0
    %489 = vmatpush1.bf16.msra.mxu0 %v183
    %490 = vmatprep.subr.bf16.mxu0 0
    %491 = vmatpush1.bf16.msra.mxu0 %v186
    %492 = vmatprep.subr.bf16.mxu0 0
    %493 = vmatpush1.bf16.msra.mxu0 %v189
    %494 = vmatprep.subr.bf16.mxu0 0
    %495 = vmatpush1.bf16.msra.mxu0 0
    %496 = vmatprep.subr.bf16.mxu0 0
    %497 = vmatpush1.bf16.msra.mxu0 0
    %498 = vmatprep.subr.bf16.mxu0 0
    %499 = vmatpush1.bf16.msra.mxu0 0
    %500 = vmatprep.subr.bf16.mxu0 0
    %501 = vmatpush1.bf16.msra.mxu0 0
    %502 = vmatprep.subr.bf16.mxu0 0
    %503 = vmatpush1.bf16.msra.mxu0 0
    %504 = vmatprep.subr.bf16.mxu0 0
    %505 = vmatpush1.bf16.msra.mxu0 0
    %506 = vmatprep.subr.bf16.mxu0 0
    %507 = vmatpush1.bf16.msra.mxu0 0
    %508 = vmatprep.subr.bf16.mxu0 0
    %509 = vmatpush1.bf16.msra.mxu0 0
    %510 = vmatprep.mubr.bf16.mxu0 0
    %511 = vmatmul.mubr.bf16.gmra.mrb[0].mxu0 %v436
    %v512 = vpop.f32.mrb[0].mxu0
    %v513 = vadd.f32 0.0, %v512
    %v514 = vpop.f32.mrb[0].mxu0
    %v515 = vpop.f32.mrb[0].mxu0
    %v516 = vpop.f32.mrb[0].mxu0
    %517 = vdwg.mxu0
    %s518 = scalar_lea.vmem [#allocation3], 2
    %v519 = vld [vmem:[%s518] ss:$8 sm:$0x7]
    %v520 = vadd.f32 %v519, %v472
    %v521 = vxor.u32 %v520, 2147483648
    %v522 = vmul.f32 %v521, 1.442695
    %v523 = vpow.pop %v522
    %v524 = vadd.f32 %v523, 1.0
    %v525 = vrcp.pop %v524
    %v526 = vmul.f32 1.0, %v525
    %v528 = vrot.slane %v519, 1
    %v530 = vadd.f32 %v528, %v474
    %v531 = vxor.u32 %v530, 2147483648
    %v532 = vmul.f32 %v531, 1.442695
    %v533 = vpow.pop %v532
    %v534 = vadd.f32 %v533, 1.0
    %v535 = vrcp.pop %v534
    %v536 = vmul.f32 1.0, %v535
    %v537 = vadd.f32 %v513, %v83
    %v538 = vmul.f32 %v526, %v537
    %v539 = vrot.slane %v519, 2
    %v541 = vadd.f32 %v539, %v538
    %v542 = vtanh.pop %v541
    %v543 = vsub.f32 1.0, %v536
    %v544 = vmul.f32 %v543, %v542
    %v545 = vmul.f32 %v536, %v434
    %v546 = vadd.f32 %v544, %v545
    %547 = vst [vmem:[#allocation8 + $0x2] sm:$0x1] %v546
    %v548 = vpack.c.bf16 %v546, %v546
    %549 = vmatprep.subr.bf16.mxu0 %v167
    %550 = vmatpush1.bf16.msra.mxu0 %v166
    %551 = vmatprep.subr.bf16.mxu0 %v170
    %552 = vmatpush1.bf16.msra.mxu0 %v169
    %553 = vmatprep.subr.bf16.mxu0 %v173
    %554 = vmatpush1.bf16.msra.mxu0 %v172
    %555 = vmatprep.subr.bf16.mxu0 %v176
    %556 = vmatpush1.bf16.msra.mxu0 %v175
    %557 = vmatprep.subr.bf16.mxu0 %v179
    %558 = vmatpush1.bf16.msra.mxu0 %v178
    %559 = vmatprep.subr.bf16.mxu0 %v182
    %560 = vmatpush1.bf16.msra.mxu0 %v181
    %561 = vmatprep.subr.bf16.mxu0 %v185
    %562 = vmatpush1.bf16.msra.mxu0 %v184
    %563 = vmatprep.subr.bf16.mxu0 %v188
    %564 = vmatpush1.bf16.msra.mxu0 %v187
    %565 = vmatprep.subr.bf16.mxu0 0
    %566 = vmatpush1.bf16.msra.mxu0 0
    %567 = vmatprep.subr.bf16.mxu0 0
    %568 = vmatpush1.bf16.msra.mxu0 0
    %569 = vmatprep.subr.bf16.mxu0 0
    %570 = vmatpush1.bf16.msra.mxu0 0
    %571 = vmatprep.subr.bf16.mxu0 0
    %572 = vmatpush1.bf16.msra.mxu0 0
    %573 = vmatprep.subr.bf16.mxu0 0
    %574 = vmatpush1.bf16.msra.mxu0 0
    %575 = vmatprep.subr.bf16.mxu0 0
    %576 = vmatpush1.bf16.msra.mxu0 0
    %577 = vmatprep.subr.bf16.mxu0 0
    %578 = vmatpush1.bf16.msra.mxu0 0
    %579 = vmatprep.subr.bf16.mxu0 0
    %580 = vmatpush1.bf16.msra.mxu0 0
    %581 = vmatprep.mubr.bf16.mxu0 0
    %582 = vmatmul.mubr.bf16.gmra.mrb[0].mxu0 %v548
    %v583 = vpop.f32.mrb[0].mxu0
    %v584 = vadd.f32 0.0, %v583
    %v585 = vpop.f32.mrb[0].mxu0
    %v586 = vadd.f32 0.0, %v585
    %v587 = vpop.f32.mrb[0].mxu0
    %v588 = vpop.f32.mrb[0].mxu0
    %589 = vdwg.mxu0
    %590 = vmatprep.subr.bf16.mxu0 0
    %591 = vmatpush1.bf16.msra.mxu0 %v168
    %592 = vmatprep.subr.bf16.mxu0 0
    %593 = vmatpush1.bf16.msra.mxu0 %v171
    %594 = vmatprep.subr.bf16.mxu0 0
    %595 = vmatpush1.bf16.msra.mxu0 %v174
    %596 = vmatprep.subr.bf16.mxu0 0
    %597 = vmatpush1.bf16.msra.mxu0 %v177
    %598 = vmatprep.subr.bf16.mxu0 0
    %599 = vmatpush1.bf16.msra.mxu0 %v180
    %600 = vmatprep.subr.bf16.mxu0 0
    %601 = vmatpush1.bf16.msra.mxu0 %v183
    %602 = vmatprep.subr.bf16.mxu0 0
    %603 = vmatpush1.bf16.msra.mxu0 %v186
    %604 = vmatprep.subr.bf16.mxu0 0
    %605 = vmatpush1.bf16.msra.mxu0 %v189
    %606 = vmatprep.subr.bf16.mxu0 0
    %607 = vmatpush1.bf16.msra.mxu0 0
    %608 = vmatprep.subr.bf16.mxu0 0
    %609 = vmatpush1.bf16.msra.mxu0 0
    %610 = vmatprep.subr.bf16.mxu0 0
    %611 = vmatpush1.bf16.msra.mxu0 0
    %612 = vmatprep.subr.bf16.mxu0 0
    %613 = vmatpush1.bf16.msra.mxu0 0
    %614 = vmatprep.subr.bf16.mxu0 0
    %615 = vmatpush1.bf16.msra.mxu0 0
    %616 = vmatprep.subr.bf16.mxu0 0
    %617 = vmatpush1.bf16.msra.mxu0 0
    %618 = vmatprep.subr.bf16.mxu0 0
    %619 = vmatpush1.bf16.msra.mxu0 0
    %620 = vmatprep.subr.bf16.mxu0 0
    %621 = vmatpush1.bf16.msra.mxu0 0
    %622 = vmatprep.mubr.bf16.mxu0 0
    %623 = vmatmul.mubr.bf16.gmra.mrb[0].mxu0 %v548
    %v624 = vpop.f32.mrb[0].mxu0
    %v625 = vadd.f32 0.0, %v624
    %v626 = vpop.f32.mrb[0].mxu0
    %v627 = vpop.f32.mrb[0].mxu0
    %v628 = vpop.f32.mrb[0].mxu0
    %629 = vdwg.mxu0
    %s630 = scalar_lea.vmem [#allocation3], 3
    %v631 = vld [vmem:[%s630] ss:$8 sm:$0x7]
    %v632 = vadd.f32 %v631, %v584
    %v633 = vxor.u32 %v632, 2147483648
    %v634 = vmul.f32 %v633, 1.442695
    %v635 = vpow.pop %v634
    %v636 = vadd.f32 %v635, 1.0
    %v637 = vrcp.pop %v636
    %v638 = vmul.f32 1.0, %v637
    %v640 = vrot.slane %v631, 1
    %v642 = vadd.f32 %v640, %v586
    %v643 = vxor.u32 %v642, 2147483648
    %v644 = vmul.f32 %v643, 1.442695
    %v645 = vpow.pop %v644
    %v646 = vadd.f32 %v645, 1.0
    %v647 = vrcp.pop %v646
    %v648 = vmul.f32 1.0, %v647
    %v649 = vadd.f32 %v625, %v83
    %v650 = vmul.f32 %v638, %v649
    %v651 = vrot.slane %v631, 2
    %v653 = vadd.f32 %v651, %v650
    %v654 = vtanh.pop %v653
    %v655 = vsub.f32 1.0, %v648
    %v656 = vmul.f32 %v655, %v654
    %v657 = vmul.f32 %v648, %v546
    %v658 = vadd.f32 %v656, %v657
    %659 = vst [vmem:[#allocation8 + $0x3] sm:$0x1] %v658
    %v660 = vpack.c.bf16 %v658, %v658
    %661 = vmatprep.subr.bf16.mxu0 %v167
    %662 = vmatpush1.bf16.msra.mxu0 %v166
    %663 = vmatprep.subr.bf16.mxu0 %v170
    %664 = vmatpush1.bf16.msra.mxu0 %v169
    %665 = vmatprep.subr.bf16.mxu0 %v173
    %666 = vmatpush1.bf16.msra.mxu0 %v172
    %667 = vmatprep.subr.bf16.mxu0 %v176
    %668 = vmatpush1.bf16.msra.mxu0 %v175
    %669 = vmatprep.subr.bf16.mxu0 %v179
    %670 = vmatpush1.bf16.msra.mxu0 %v178
    %671 = vmatprep.subr.bf16.mxu0 %v182
    %672 = vmatpush1.bf16.msra.mxu0 %v181
    %673 = vmatprep.subr.bf16.mxu0 %v185
    %674 = vmatpush1.bf16.msra.mxu0 %v184
    %675 = vmatprep.subr.bf16.mxu0 %v188
    %676 = vmatpush1.bf16.msra.mxu0 %v187
    %677 = vmatprep.subr.bf16.mxu0 0
    %678 = vmatpush1.bf16.msra.mxu0 0
    %679 = vmatprep.subr.bf16.mxu0 0
    %680 = vmatpush1.bf16.msra.mxu0 0
    %681 = vmatprep.subr.bf16.mxu0 0
    %682 = vmatpush1.bf16.msra.mxu0 0
    %683 = vmatprep.subr.bf16.mxu0 0
    %684 = vmatpush1.bf16.msra.mxu0 0
    %685 = vmatprep.subr.bf16.mxu0 0
    %686 = vmatpush1.bf16.msra.mxu0 0
    %687 = vmatprep.subr.bf16.mxu0 0
    %688 = vmatpush1.bf16.msra.mxu0 0
    %689 = vmatprep.subr.bf16.mxu0 0
    %690 = vmatpush1.bf16.msra.mxu0 0
    %691 = vmatprep.subr.bf16.mxu0 0
    %692 = vmatpush1.bf16.msra.mxu0 0
    %693 = vmatprep.mubr.bf16.mxu0 0
    %694 = vmatmul.mubr.bf16.gmra.mrb[0].mxu0 %v660
    %v695 = vpop.f32.mrb[0].mxu0
    %v696 = vadd.f32 0.0, %v695
    %v697 = vpop.f32.mrb[0].mxu0
    %v698 = vadd.f32 0.0, %v697
    %v699 = vpop.f32.mrb[0].mxu0
    %v700 = vpop.f32.mrb[0].mxu0
    %701 = vdwg.mxu0
    %702 = vmatprep.subr.bf16.mxu0 0
    %703 = vmatpush1.bf16.msra.mxu0 %v168
    %704 = vmatprep.subr.bf16.mxu0 0
    %705 = vmatpush1.bf16.msra.mxu0 %v171
    %706 = vmatprep.subr.bf16.mxu0 0
    %707 = vmatpush1.bf16.msra.mxu0 %v174
    %708 = vmatprep.subr.bf16.mxu0 0
    %709 = vmatpush1.bf16.msra.mxu0 %v177
    %710 = vmatprep.subr.bf16.mxu0 0
    %711 = vmatpush1.bf16.msra.mxu0 %v180
    %712 = vmatprep.subr.bf16.mxu0 0
    %713 = vmatpush1.bf16.msra.mxu0 %v183
    %714 = vmatprep.subr.bf16.mxu0 0
    %715 = vmatpush1.bf16.msra.mxu0 %v186
    %716 = vmatprep.subr.bf16.mxu0 0
    %717 = vmatpush1.bf16.msra.mxu0 %v189
    %718 = vmatprep.subr.bf16.mxu0 0
    %719 = vmatpush1.bf16.msra.mxu0 0
    %720 = vmatprep.subr.bf16.mxu0 0
    %721 = vmatpush1.bf16.msra.mxu0 0
    %722 = vmatprep.subr.bf16.mxu0 0
    %723 = vmatpush1.bf16.msra.mxu0 0
    %724 = vmatprep.subr.bf16.mxu0 0
    %725 = vmatpush1.bf16.msra.mxu0 0
    %726 = vmatprep.subr.bf16.mxu0 0
    %727 = vmatpush1.bf16.msra.mxu0 0
    %728 = vmatprep.subr.bf16.mxu0 0
    %729 = vmatpush1.bf16.msra.mxu0 0
    %730 = vmatprep.subr.bf16.mxu0 0
    %731 = vmatpush1.bf16.msra.mxu0 0
    %732 = vmatprep.subr.bf16.mxu0 0
    %733 = vmatpush1.bf16.msra.mxu0 0
    %734 = vmatprep.mubr.bf16.mxu0 0
    %735 = vmatmul.mubr.bf16.gmra.mrb[0].mxu0 %v660
    %v736 = vpop.f32.mrb[0].mxu0
    %v737 = vadd.f32 0.0, %v736
    %v738 = vpop.f32.mrb[0].mxu0
    %v739 = vpop.f32.mrb[0].mxu0
    %v740 = vpop.f32.mrb[0].mxu0
    %741 = vdwg.mxu0
    %s742 = scalar_lea.vmem [#allocation3], 4
    %v743 = vld [vmem:[%s742] ss:$8 sm:$0x7]
    %v744 = vadd.f32 %v743, %v696
    %v745 = vxor.u32 %v744, 2147483648
    %v746 = vmul.f32 %v745, 1.442695
    %v747 = vpow.pop %v746
    %v748 = vadd.f32 %v747, 1.0
    %v749 = vrcp.pop %v748
    %v750 = vmul.f32 1.0, %v749
    %v752 = vrot.slane %v743, 1
    %v754 = vadd.f32 %v752, %v698
    %v755 = vxor.u32 %v754, 2147483648
    %v756 = vmul.f32 %v755, 1.442695
    %v757 = vpow.pop %v756
    %v758 = vadd.f32 %v757, 1.0
    %v759 = vrcp.pop %v758
    %v760 = vmul.f32 1.0, %v759
    %v761 = vadd.f32 %v737, %v83
    %v762 = vmul.f32 %v750, %v761
    %v763 = vrot.slane %v743, 2
    %v765 = vadd.f32 %v763, %v762
    %v766 = vtanh.pop %v765
    %v767 = vsub.f32 1.0, %v760
    %v768 = vmul.f32 %v767, %v766
    %v769 = vmul.f32 %v760, %v658
    %v770 = vadd.f32 %v768, %v769
    %771 = vst [vmem:[#allocation8 + $0x4] sm:$0x1] %v770
    %v772 = vpack.c.bf16 %v770, %v770
    %773 = vmatprep.subr.bf16.mxu0 %v167
    %774 = vmatpush1.bf16.msra.mxu0 %v166
    %775 = vmatprep.subr.bf16.mxu0 %v170
    %776 = vmatpush1.bf16.msra.mxu0 %v169
    %777 = vmatprep.subr.bf16.mxu0 %v173
    %778 = vmatpush1.bf16.msra.mxu0 %v172
    %779 = vmatprep.subr.bf16.mxu0 %v176
    %780 = vmatpush1.bf16.msra.mxu0 %v175
    %781 = vmatprep.subr.bf16.mxu0 %v179
    %782 = vmatpush1.bf16.msra.mxu0 %v178
    %783 = vmatprep.subr.bf16.mxu0 %v182
    %784 = vmatpush1.bf16.msra.mxu0 %v181
    %785 = vmatprep.subr.bf16.mxu0 %v185
    %786 = vmatpush1.bf16.msra.mxu0 %v184
    %787 = vmatprep.subr.bf16.mxu0 %v188
    %788 = vmatpush1.bf16.msra.mxu0 %v187
    %789 = vmatprep.subr.bf16.mxu0 0
    %790 = vmatpush1.bf16.msra.mxu0 0
    %791 = vmatprep.subr.bf16.mxu0 0
    %792 = vmatpush1.bf16.msra.mxu0 0
    %793 = vmatprep.subr.bf16.mxu0 0
    %794 = vmatpush1.bf16.msra.mxu0 0
    %795 = vmatprep.subr.bf16.mxu0 0
    %796 = vmatpush1.bf16.msra.mxu0 0
    %797 = vmatprep.subr.bf16.mxu0 0
    %798 = vmatpush1.bf16.msra.mxu0 0
    %799 = vmatprep.subr.bf16.mxu0 0
    %800 = vmatpush1.bf16.msra.mxu0 0
    %801 = vmatprep.subr.bf16.mxu0 0
    %802 = vmatpush1.bf16.msra.mxu0 0
    %803 = vmatprep.subr.bf16.mxu0 0
    %804 = vmatpush1.bf16.msra.mxu0 0
    %805 = vmatprep.mubr.bf16.mxu0 0
    %806 = vmatmul.mubr.bf16.gmra.mrb[0].mxu0 %v772
    %v807 = vpop.f32.mrb[0].mxu0
    %v808 = vadd.f32 0.0, %v807
    %v809 = vpop.f32.mrb[0].mxu0
    %v810 = vadd.f32 0.0, %v809
    %v811 = vpop.f32.mrb[0].mxu0
    %v812 = vpop.f32.mrb[0].mxu0
    %813 = vdwg.mxu0
    %814 = vmatprep.subr.bf16.mxu0 0
    %815 = vmatpush1.bf16.msra.mxu0 %v168
    %816 = vmatprep.subr.bf16.mxu0 0
    %817 = vmatpush1.bf16.msra.mxu0 %v171
    %818 = vmatprep.subr.bf16.mxu0 0
    %819 = vmatpush1.bf16.msra.mxu0 %v174
    %820 = vmatprep.subr.bf16.mxu0 0
    %821 = vmatpush1.bf16.msra.mxu0 %v177
    %822 = vmatprep.subr.bf16.mxu0 0
    %823 = vmatpush1.bf16.msra.mxu0 %v180
    %824 = vmatprep.subr.bf16.mxu0 0
    %825 = vmatpush1.bf16.msra.mxu0 %v183
    %826 = vmatprep.subr.bf16.mxu0 0
    %827 = vmatpush1.bf16.msra.mxu0 %v186
    %828 = vmatprep.subr.bf16.mxu0 0
    %829 = vmatpush1.bf16.msra.mxu0 %v189
    %830 = vmatprep.subr.bf16.mxu0 0
    %831 = vmatpush1.bf16.msra.mxu0 0
    %832 = vmatprep.subr.bf16.mxu0 0
    %833 = vmatpush1.bf16.msra.mxu0 0
    %834 = vmatprep.subr.bf16.mxu0 0
    %835 = vmatpush1.bf16.msra.mxu0 0
    %836 = vmatprep.subr.bf16.mxu0 0
    %837 = vmatpush1.bf16.msra.mxu0 0
    %838 = vmatprep.subr.bf16.mxu0 0
    %839 = vmatpush1.bf16.msra.mxu0 0
    %840 = vmatprep.subr.bf16.mxu0 0
    %841 = vmatpush1.bf16.msra.mxu0 0
    %842 = vmatprep.subr.bf16.mxu0 0
    %843 = vmatpush1.bf16.msra.mxu0 0
    %844 = vmatprep.subr.bf16.mxu0 0
    %845 = vmatpush1.bf16.msra.mxu0 0
    %846 = vmatprep.mubr.bf16.mxu0 0
    %847 = vmatmul.mubr.bf16.gmra.mrb[0].mxu0 %v772
    %v848 = vpop.f32.mrb[0].mxu0
    %v849 = vadd.f32 0.0, %v848
    %v850 = vpop.f32.mrb[0].mxu0
    %v851 = vpop.f32.mrb[0].mxu0
    %v852 = vpop.f32.mrb[0].mxu0
    %853 = vdwg.mxu0
    %s854 = scalar_lea.vmem [#allocation3], 5
    %v855 = vld [vmem:[%s854] ss:$8 sm:$0x7]
    %v856 = vadd.f32 %v855, %v808
    %v857 = vxor.u32 %v856, 2147483648
    %v858 = vmul.f32 %v857, 1.442695
    %v859 = vpow.pop %v858
    %v860 = vadd.f32 %v859, 1.0
    %v861 = vrcp.pop %v860
    %v862 = vmul.f32 1.0, %v861
    %v864 = vrot.slane %v855, 1
    %v866 = vadd.f32 %v864, %v810
    %v867 = vxor.u32 %v866, 2147483648
    %v868 = vmul.f32 %v867, 1.442695
    %v869 = vpow.pop %v868
    %v870 = vadd.f32 %v869, 1.0
    %v871 = vrcp.pop %v870
    %v872 = vmul.f32 1.0, %v871
    %v873 = vadd.f32 %v849, %v83
    %v874 = vmul.f32 %v862, %v873
    %v875 = vrot.slane %v855, 2
    %v877 = vadd.f32 %v875, %v874
    %v878 = vtanh.pop %v877
    %v879 = vsub.f32 1.0, %v872
    %v880 = vmul.f32 %v879, %v878
    %v881 = vmul.f32 %v872, %v770
    %v882 = vadd.f32 %v880, %v881
    %883 = vst [vmem:[#allocation8 + $0x5] sm:$0x1] %v882
    %v884 = vpack.c.bf16 %v882, %v882
    %885 = vmatprep.subr.bf16.mxu0 %v167
    %886 = vmatpush1.bf16.msra.mxu0 %v166
    %887 = vmatprep.subr.bf16.mxu0 %v170
    %888 = vmatpush1.bf16.msra.mxu0 %v169
    %889 = vmatprep.subr.bf16.mxu0 %v173
    %890 = vmatpush1.bf16.msra.mxu0 %v172
    %891 = vmatprep.subr.bf16.mxu0 %v176
    %892 = vmatpush1.bf16.msra.mxu0 %v175
    %893 = vmatprep.subr.bf16.mxu0 %v179
    %894 = vmatpush1.bf16.msra.mxu0 %v178
    %895 = vmatprep.subr.bf16.mxu0 %v182
    %896 = vmatpush1.bf16.msra.mxu0 %v181
    %897 = vmatprep.subr.bf16.mxu0 %v185
    %898 = vmatpush1.bf16.msra.mxu0 %v184
    %899 = vmatprep.subr.bf16.mxu0 %v188
    %900 = vmatpush1.bf16.msra.mxu0 %v187
    %901 = vmatprep.subr.bf16.mxu0 0
    %902 = vmatpush1.bf16.msra.mxu0 0
    %903 = vmatprep.subr.bf16.mxu0 0
    %904 = vmatpush1.bf16.msra.mxu0 0
    %905 = vmatprep.subr.bf16.mxu0 0
    %906 = vmatpush1.bf16.msra.mxu0 0
    %907 = vmatprep.subr.bf16.mxu0 0
    %908 = vmatpush1.bf16.msra.mxu0 0
    %909 = vmatprep.subr.bf16.mxu0 0
    %910 = vmatpush1.bf16.msra.mxu0 0
    %911 = vmatprep.subr.bf16.mxu0 0
    %912 = vmatpush1.bf16.msra.mxu0 0
    %913 = vmatprep.subr.bf16.mxu0 0
    %914 = vmatpush1.bf16.msra.mxu0 0
    %915 = vmatprep.subr.bf16.mxu0 0
    %916 = vmatpush1.bf16.msra.mxu0 0
    %917 = vmatprep.mubr.bf16.mxu0 0
    %918 = vmatmul.mubr.bf16.gmra.mrb[0].mxu0 %v884
    %v919 = vpop.f32.mrb[0].mxu0
    %v920 = vadd.f32 0.0, %v919
    %v921 = vpop.f32.mrb[0].mxu0
    %v922 = vadd.f32 0.0, %v921
    %v923 = vpop.f32.mrb[0].mxu0
    %v924 = vpop.f32.mrb[0].mxu0
    %925 = vdwg.mxu0
    %926 = vmatprep.subr.bf16.mxu0 0
    %927 = vmatpush1.bf16.msra.mxu0 %v168
    %928 = vmatprep.subr.bf16.mxu0 0
    %929 = vmatpush1.bf16.msra.mxu0 %v171
    %930 = vmatprep.subr.bf16.mxu0 0
    %931 = vmatpush1.bf16.msra.mxu0 %v174
    %932 = vmatprep.subr.bf16.mxu0 0
    %933 = vmatpush1.bf16.msra.mxu0 %v177
    %934 = vmatprep.subr.bf16.mxu0 0
    %935 = vmatpush1.bf16.msra.mxu0 %v180
    %936 = vmatprep.subr.bf16.mxu0 0
    %937 = vmatpush1.bf16.msra.mxu0 %v183
    %938 = vmatprep.subr.bf16.mxu0 0
    %939 = vmatpush1.bf16.msra.mxu0 %v186
    %940 = vmatprep.subr.bf16.mxu0 0
    %941 = vmatpush1.bf16.msra.mxu0 %v189
    %942 = vmatprep.subr.bf16.mxu0 0
    %943 = vmatpush1.bf16.msra.mxu0 0
    %944 = vmatprep.subr.bf16.mxu0 0
    %945 = vmatpush1.bf16.msra.mxu0 0
    %946 = vmatprep.subr.bf16.mxu0 0
    %947 = vmatpush1.bf16.msra.mxu0 0
    %948 = vmatprep.subr.bf16.mxu0 0
    %949 = vmatpush1.bf16.msra.mxu0 0
    %950 = vmatprep.subr.bf16.mxu0 0
    %951 = vmatpush1.bf16.msra.mxu0 0
    %952 = vmatprep.subr.bf16.mxu0 0
    %953 = vmatpush1.bf16.msra.mxu0 0
    %954 = vmatprep.subr.bf16.mxu0 0
    %955 = vmatpush1.bf16.msra.mxu0 0
    %956 = vmatprep.subr.bf16.mxu0 0
    %957 = vmatpush1.bf16.msra.mxu0 0
    %958 = vmatprep.mubr.bf16.mxu0 0
    %959 = vmatmul.mubr.bf16.gmra.mrb[0].mxu0 %v884
    %v960 = vpop.f32.mrb[0].mxu0
    %v961 = vadd.f32 0.0, %v960
    %v962 = vpop.f32.mrb[0].mxu0
    %v963 = vpop.f32.mrb[0].mxu0
    %v964 = vpop.f32.mrb[0].mxu0
    %965 = vdwg.mxu0
    %s966 = scalar_lea.vmem [#allocation3], 6
    %v967 = vld [vmem:[%s966] ss:$8 sm:$0x7]
    %v968 = vadd.f32 %v967, %v920
    %v969 = vxor.u32 %v968, 2147483648
    %v970 = vmul.f32 %v969, 1.442695
    %v971 = vpow.pop %v970
    %v972 = vadd.f32 %v971, 1.0
    %v973 = vrcp.pop %v972
    %v974 = vmul.f32 1.0, %v973
    %v976 = vrot.slane %v967, 1
    %v978 = vadd.f32 %v976, %v922
    %v979 = vxor.u32 %v978, 2147483648
    %v980 = vmul.f32 %v979, 1.442695
    %v981 = vpow.pop %v980
    %v982 = vadd.f32 %v981, 1.0
    %v983 = vrcp.pop %v982
    %v984 = vmul.f32 1.0, %v983
    %v985 = vadd.f32 %v961, %v83
    %v986 = vmul.f32 %v974, %v985
    %v987 = vrot.slane %v967, 2
    %v989 = vadd.f32 %v987, %v986
    %v990 = vtanh.pop %v989
    %v991 = vsub.f32 1.0, %v984
    %v992 = vmul.f32 %v991, %v990
    %v993 = vmul.f32 %v984, %v882
    %v994 = vadd.f32 %v992, %v993
    %995 = vst [vmem:[#allocation8 + $0x6] sm:$0x1] %v994
    %v996 = vpack.c.bf16 %v994, %v994
    %997 = vmatprep.subr.bf16.mxu0 %v167
    %998 = vmatpush1.bf16.msra.mxu0 %v166
    %999 = vmatprep.subr.bf16.mxu0 %v170
    %1000 = vmatpush1.bf16.msra.mxu0 %v169
    %1001 = vmatprep.subr.bf16.mxu0 %v173
    %1002 = vmatpush1.bf16.msra.mxu0 %v172
    %1003 = vmatprep.subr.bf16.mxu0 %v176
    %1004 = vmatpush1.bf16.msra.mxu0 %v175
    %1005 = vmatprep.subr.bf16.mxu0 %v179
    %1006 = vmatpush1.bf16.msra.mxu0 %v178
    %1007 = vmatprep.subr.bf16.mxu0 %v182
    %1008 = vmatpush1.bf16.msra.mxu0 %v181
    %1009 = vmatprep.subr.bf16.mxu0 %v185
    %1010 = vmatpush1.bf16.msra.mxu0 %v184
    %1011 = vmatprep.subr.bf16.mxu0 %v188
    %1012 = vmatpush1.bf16.msra.mxu0 %v187
    %1013 = vmatprep.subr.bf16.mxu0 0
    %1014 = vmatpush1.bf16.msra.mxu0 0
    %1015 = vmatprep.subr.bf16.mxu0 0
    %1016 = vmatpush1.bf16.msra.mxu0 0
    %1017 = vmatprep.subr.bf16.mxu0 0
    %1018 = vmatpush1.bf16.msra.mxu0 0
    %1019 = vmatprep.subr.bf16.mxu0 0
    %1020 = vmatpush1.bf16.msra.mxu0 0
    %1021 = vmatprep.subr.bf16.mxu0 0
    %1022 = vmatpush1.bf16.msra.mxu0 0
    %1023 = vmatprep.subr.bf16.mxu0 0
    %1024 = vmatpush1.bf16.msra.mxu0 0
    %1025 = vmatprep.subr.bf16.mxu0 0
    %1026 = vmatpush1.bf16.msra.mxu0 0
    %1027 = vmatprep.subr.bf16.mxu0 0
    %1028 = vmatpush1.bf16.msra.mxu0 0
    %1029 = vmatprep.mubr.bf16.mxu0 0
    %1030 = vmatmul.mubr.bf16.gmra.mrb[0].mxu0 %v996
    %v1031 = vpop.f32.mrb[0].mxu0
    %v1032 = vadd.f32 0.0, %v1031
    %v1033 = vpop.f32.mrb[0].mxu0
    %v1034 = vadd.f32 0.0, %v1033
    %v1035 = vpop.f32.mrb[0].mxu0
    %v1036 = vpop.f32.mrb[0].mxu0
    %1037 = vdwg.mxu0
    %1038 = vmatprep.subr.bf16.mxu0 0
    %1039 = vmatpush1.bf16.msra.mxu0 %v168
    %1040 = vmatprep.subr.bf16.mxu0 0
    %1041 = vmatpush1.bf16.msra.mxu0 %v171
    %1042 = vmatprep.subr.bf16.mxu0 0
    %1043 = vmatpush1.bf16.msra.mxu0 %v174
    %1044 = vmatprep.subr.bf16.mxu0 0
    %1045 = vmatpush1.bf16.msra.mxu0 %v177
    %1046 = vmatprep.subr.bf16.mxu0 0
    %1047 = vmatpush1.bf16.msra.mxu0 %v180
    %1048 = vmatprep.subr.bf16.mxu0 0
    %1049 = vmatpush1.bf16.msra.mxu0 %v183
    %1050 = vmatprep.subr.bf16.mxu0 0
    %1051 = vmatpush1.bf16.msra.mxu0 %v186
    %1052 = vmatprep.subr.bf16.mxu0 0
    %1053 = vmatpush1.bf16.msra.mxu0 %v189
    %1054 = vmatprep.subr.bf16.mxu0 0
    %1055 = vmatpush1.bf16.msra.mxu0 0
    %1056 = vmatprep.subr.bf16.mxu0 0
    %1057 = vmatpush1.bf16.msra.mxu0 0
    %1058 = vmatprep.subr.bf16.mxu0 0
    %1059 = vmatpush1.bf16.msra.mxu0 0
    %1060 = vmatprep.subr.bf16.mxu0 0
    %1061 = vmatpush1.bf16.msra.mxu0 0
    %1062 = vmatprep.subr.bf16.mxu0 0
    %1063 = vmatpush1.bf16.msra.mxu0 0
    %1064 = vmatprep.subr.bf16.mxu0 0
    %1065 = vmatpush1.bf16.msra.mxu0 0
    %1066 = vmatprep.subr.bf16.mxu0 0
    %1067 = vmatpush1.bf16.msra.mxu0 0
    %1068 = vmatprep.subr.bf16.mxu0 0
    %1069 = vmatpush1.bf16.msra.mxu0 0
    %1070 = vmatprep.mubr.bf16.mxu0 0
    %1071 = vmatmul.mubr.bf16.gmra.mrb[0].mxu0 %v996
    %v1072 = vpop.f32.mrb[0].mxu0
    %v1073 = vadd.f32 0.0, %v1072
    %v1074 = vpop.f32.mrb[0].mxu0
    %v1075 = vpop.f32.mrb[0].mxu0
    %v1076 = vpop.f32.mrb[0].mxu0
    %1077 = vdwg.mxu0
    %s1078 = scalar_lea.vmem [#allocation3], 7
    %v1079 = vld [vmem:[%s1078] ss:$8 sm:$0x7]
    %v1080 = vadd.f32 %v1079, %v1032
    %v1081 = vxor.u32 %v1080, 2147483648
    %v1082 = vmul.f32 %v1081, 1.442695
    %v1083 = vpow.pop %v1082
    %v1084 = vadd.f32 %v1083, 1.0
    %v1085 = vrcp.pop %v1084
    %v1086 = vmul.f32 1.0, %v1085
    %v1088 = vrot.slane %v1079, 1
    %v1090 = vadd.f32 %v1088, %v1034
    %v1091 = vxor.u32 %v1090, 2147483648
    %v1092 = vmul.f32 %v1091, 1.442695
    %v1093 = vpow.pop %v1092
    %v1094 = vadd.f32 %v1093, 1.0
    %v1095 = vrcp.pop %v1094
    %v1096 = vmul.f32 1.0, %v1095
    %v1097 = vadd.f32 %v1073, %v83
    %v1098 = vmul.f32 %v1086, %v1097
    %v1099 = vrot.slane %v1079, 2
    %v1101 = vadd.f32 %v1099, %v1098
    %v1102 = vtanh.pop %v1101
    %v1103 = vsub.f32 1.0, %v1096
    %v1104 = vmul.f32 %v1103, %v1102
    %v1105 = vmul.f32 %v1096, %v994
    %v1106 = vadd.f32 %v1104, %v1105
    %1107 = vst [vmem:[#allocation8 + $0x7] sm:$0x1] %v1106
    %1108 = vst [vmem:[#allocation2] sm:$0x1] %v1106
    // Predicated region
    $region30: #{tpu_custom_call.1} parent=1 // pred_check
      _
    $region31: #{tpu_custom_call.1} parent=1 // pred_check_branch
      %1110 = sbr.rel (0) target = $region33
    $region32: #{tpu_custom_call.1} parent=1 // pred_region
      %s1112 = ssub.s32 128, 128
      %1113 = vsyncadd [#allocation5], %s1112
      %s1115 = sshll.u32 [#allocation8], 4
      %s1116 = int_to_ptr.vmem [resolvable:$true] %s1115
      %1118 = dma.vmem_to_hbm [thread:$0]  %s1116, 128, %s4, [#allocation5]
    $region33: #{tpu_custom_call.1} parent=1 // pred_fallthru
      _
    // Predicated region
    $region34: #{tpu_custom_call.1} parent=1 // pred_check
      _
    $region35: #{tpu_custom_call.1} parent=1 // pred_check_branch
      %1120 = sbr.rel (0) target = $region37
    $region36: #{tpu_custom_call.1} parent=1 // pred_region
      %1121 = dma.done [#allocation5], 128
    $region37: #{tpu_custom_call.1} parent=1 // pred_fallthru
      _
    %1122 = vsyncpa [#allocation4], 1
    %1123 = vsyncpa [#allocation7], 1
    %1124 = vsyncpa [#allocation5], 1

</llo_original>
